<compile_context>
chip_gen: v6e
topology: v6e:2x2x1
jax: 0.10.0
libtpu: 0.0.40
codegen_flags: <defaults>
</compile_context>

<pallas_src>
import functools

import jax
import jax.numpy as jnp
from jax.experimental import pallas as pl
from jax.experimental.pallas import tpu as pltpu

EPS_BN = 1e-5
EPS_GLN = 1e-5
LANE = 128

_ENC_KEYS = ("we", "esc", "esh", "wb", "bb")
_BLK_KEYS = ("w1", "b1", "s1", "t1", "wdw", "bdw", "s2", "t2",
             "wp", "bp", "wf1", "bf1", "wf2", "bf2")


# ---------------------------------------------------------------------------
# Fused kernel: encoder -> streamed ConvSE blocks -> GlobalLayerNorm
# ---------------------------------------------------------------------------
def _fused_kernel(patch_ref, we_ref, esc_ref, esh_ref, wb_ref, bb_ref,
                  w1_ref, b1_ref, s1_ref, t1_ref, wdw_ref, bdw_ref,
                  s2_ref, t2_ref, wp_ref, bp_ref,
                  wf1_ref, bf1_ref, wf2_ref, bf2_ref,
                  prelu_ref, dsel_ref, o_ref, feat_ref,
                  *, dil_unique, nb, seq_len, bblk, p_real):
    f32 = jnp.float32
    bf16 = jnp.bfloat16
    T = seq_len
    n = bblk * T
    blk = pl.program_id(1)

    # time index within each flattened batch segment (depthwise edge masks)
    t_idx = jax.lax.broadcasted_iota(jnp.int32, (n, 1), 0) % T

    # ---- encoder conv (patch matmul) + folded BN(eval) + ReLU + bottleneck --
    # Runs only on the first block step; result persists in the VMEM scratch.
    @pl.when(blk == 0)
    def _():
        patches = patch_ref[...].astype(bf16)                       # (n, L)
        h = jnp.dot(patches, we_ref[...], preferred_element_type=f32)
        h = jnp.maximum(h * esc_ref[...] + esh_ref[...], 0.0)
        feat_ref[...] = (jnp.dot(h.astype(bf16), wb_ref[...],
                                 preferred_element_type=f32) + bb_ref[...])

    xres = feat_ref[...]
    a1 = prelu_ref[2 * blk]
    a2 = prelu_ref[2 * blk + 1]

    # 1x1 conv (P -> M) + PReLU + BatchNorm (inference, folded scale/shift)
    h = (jnp.dot(xres.astype(bf16), w1_ref[0], preferred_element_type=f32)
         + b1_ref[0])
    h = jnp.where(h > 0, h, a1 * h)
    h = h * s1_ref[0] + t1_ref[0]

    # dilated depthwise conv, kernel=3, zero-padded 'same': XLU sublane rolls
    # with per-sequence edge masks.  The current block's dilation is selected
    # by a static sum-of-masked-branches over the (few) distinct dilation
    # values, so every pltpu.roll shift stays static.
    dsel = dsel_ref[blk]
    wdw = wdw_ref[0]                                                # (3, Mp)
    h_prev = jnp.zeros_like(h)
    h_next = jnp.zeros_like(h)
    for j, d in enumerate(dil_unique):
        sel = (dsel == j).astype(f32)
        hp = jnp.where(t_idx >= d, pltpu.roll(h, shift=d, axis=0), 0.0)
        hn = jnp.where(t_idx < T - d, pltpu.roll(h, shift=n - d, axis=0), 0.0)
        h_prev = h_prev + sel * hp
        h_next = h_next + sel * hn
    hdw = (wdw[0:1, :] * h_prev + wdw[1:2, :] * h + wdw[2:3, :] * h_next
           + bdw_ref[0])
    hdw = jnp.where(hdw > 0, hdw, a2 * hdw)
    hdw = hdw * s2_ref[0] + t2_ref[0]

    # pointwise conv (M -> P)
    out = (jnp.dot(hdw.astype(bf16), wp_ref[0], preferred_element_type=f32)
           + bp_ref[0])

    # SE gate: per-sequence mean over time, bottleneck MLP, sigmoid
    out3 = out.reshape(bblk, T, -1)
    y = jnp.mean(out3, axis=1)                                      # (bblk, Pp)
    y = jnp.maximum(jnp.dot(y.astype(bf16), wf1_ref[0],
                            preferred_element_type=f32) + bf1_ref[0], 0.0)
    y = jax.nn.sigmoid(jnp.dot(y.astype(bf16), wf2_ref[0],
                               preferred_element_type=f32) + bf2_ref[0])
    out3 = out3 * y[:, None, :]

    # residual + ReLU; carried to the next block step via the scratch
    feat = jnp.maximum(xres + out3.reshape(n, -1), 0.0)
    feat_ref[...] = feat

    # ---- GlobalLayerNorm over (channel, time) per sequence, last block ------
    # Padded channel lanes are exactly zero through the whole network, so only
    # the divisor and the variance need masking against the real channel count.
    @pl.when(blk == nb - 1)
    def _():
        feat3 = feat.reshape(bblk, T, -1)
        pp = feat3.shape[2]
        cmask = (jax.lax.broadcasted_iota(jnp.int32, (1, 1, pp), 2) < p_real
                 ).astype(f32)
        inv_cnt = 1.0 / (T * p_real)
        mean = jnp.sum(jnp.sum(feat3, axis=2, keepdims=True),
                       axis=1, keepdims=True) * inv_cnt             # (bblk,1,1)
        diff = (feat3 - mean) * cmask
        var = jnp.sum(jnp.sum(diff * diff, axis=2, keepdims=True),
                      axis=1, keepdims=True) * inv_cnt
        o_ref[...] = (diff * jax.lax.rsqrt(var + EPS_GLN)).reshape(n, pp)


# ---------------------------------------------------------------------------
# Host-side parameter prep: padding, block stacking, bf16 weight casting
# ---------------------------------------------------------------------------
def _rup(v, m=LANE):
    return ((v + m - 1) // m) * m


def _pad2(a, rows, cols):
    return jnp.pad(a, ((0, rows - a.shape[0]), (0, cols - a.shape[1])))


def prepare_kernel_params(params):
    enc = params["encoder"]
    blocks = params["blocks"]
    L, H = enc["we"].shape
    P = enc["wb"].shape[1]
    M = blocks[0][0]["w1"].shape[1]
    Pr = blocks[0][0]["wf1"].shape[1]
    Hp, Pp, Mp = _rup(H), _rup(P), _rup(M)
    Prp = _rup(Pr, 8)                   # SE bottleneck: sublane rounding only
    NB = len(blocks)
    bf16 = jnp.bfloat16

    kp = dict(
        we=_pad2(enc["we"], L, Hp).astype(bf16),   # patch width L not padded
        esc=_pad2(enc["scale"], 1, Hp),
        esh=_pad2(enc["shift"], 1, Hp),
        wb=_pad2(enc["wb"], Hp, Pp).astype(bf16),
        bb=_pad2(enc["bb"], 1, Pp),
    )

    def stack(key, rows, cols, dtype=jnp.float32):
        return jnp.stack([_pad2(p[key], rows, cols) for p, _ in blocks]
                         ).astype(dtype)

    kp.update(
        w1=stack("w1", Pp, Mp, bf16), b1=stack("b1", 1, Mp),
        s1=stack("s1", 1, Mp), t1=stack("t1", 1, Mp),
        wdw=stack("wdw", 3, Mp), bdw=stack("bdw", 1, Mp),
        s2=stack("s2", 1, Mp), t2=stack("t2", 1, Mp),
        wp=stack("wp", Mp, Pp, bf16), bp=stack("bp", 1, Pp),
        wf1=stack("wf1", Pp, Prp, bf16), bf1=stack("bf1", 1, Prp),
        wf2=stack("wf2", Prp, Pp, bf16), bf2=stack("bf2", 1, Pp),
    )
    # PReLU slopes as a flat 1-D SMEM table: [2k] = slope1, [2k+1] = slope2
    kp["prelu"] = jnp.concatenate(
        [jnp.stack([p["a1"][0, 0], p["a2"][0, 0]]) for p, _ in blocks]
    ).astype(jnp.float32)

    # per-block index into the (static) set of distinct dilation values
    dil_list = [int(d) for _, d in blocks]
    dil_unique = tuple(sorted(set(dil_list)))
    kp["dsel"] = jnp.asarray([dil_unique.index(d) for d in dil_list], jnp.int32)

    dims = dict(L=L, H=H, P=P, M=M, Pr=Pr,
                Hp=Hp, Pp=Pp, Mp=Mp, Prp=Prp, NB=NB)
    return kp, dil_unique, dims


# ---------------------------------------------------------------------------
# Forward
# ---------------------------------------------------------------------------
def feature_extraction_forward(x, params, L):
    """x: (B, 1, N) in PyTorch NCW layout; returns (B, P, T) like the module."""
    stride = L // 2
    batch, _, N = x.shape
    T = (N - L) // stride + 1

    kp, dil_unique, dims = prepare_kernel_params(params)
    P, Pp, Hp, Mp, Prp, NB = (dims[k] for k in
                              ("P", "Pp", "Hp", "Mp", "Prp", "NB"))
    assert max(dil_unique) < T, "roll-based depthwise conv needs dilation < T"

    # glue: unfold encoder receptive fields (no 128-lane padding of L)
    idx = jnp.arange(T)[:, None] * stride + jnp.arange(L)[None, :]
    patches = x[:, 0, :][:, idx].reshape(batch * T, L)

    # batch tile: enough rows per step to amortize MXU / per-step overhead,
    # while keeping >=2 grid steps on the parallel axis (v7x: 2 TensorCores).
    row_target = 512
    cap = max(1, row_target // T)
    divisors = [c for c in range(1, batch + 1) if batch % c == 0]
    legal = [c for c in divisors
             if c <= cap and ((c * T) % 8 == 0 or batch // c == 1)]
    pref = [c for c in legal if batch // c >= 2]
    bblk = max(pref or legal or [batch])
    n = bblk * T
    steps = batch // bblk

    # advisory cost estimate for XLA scheduling around the custom call
    flops_enc = 2 * n * (L * Hp + Hp * Pp)
    flops_blk = 2 * n * (Pp * Mp + Mp * Pp + 3 * Mp) + 4 * bblk * Pp * Prp
    weight_bytes = sum(int(kp[k].size) * kp[k].dtype.itemsize
                       for k in _ENC_KEYS + _BLK_KEYS)
    cost = pl.CostEstimate(
        flops=steps * (flops_enc + NB * flops_blk),
        transcendentals=steps * NB * bblk * Pp,
        bytes_accessed=(int(patches.size) * 4 + batch * T * Pp * 4
                        + steps * weight_bytes))

    # explicit scoped-VMEM limit from streamed-weight + activation footprint
    blk_bytes = sum(int(kp[k].size) * kp[k].dtype.itemsize // NB
                    for k in _BLK_KEYS)
    enc_bytes = sum(int(kp[k].size) * kp[k].dtype.itemsize for k in _ENC_KEYS)
    io_bytes = n * L * 4 + n * Pp * 4
    footprint = 2 * (blk_bytes + enc_bytes + io_bytes) + n * Pp * 4
    vmem_limit = int(min(48 * 1024 * 1024,
                         max(16 * 1024 * 1024, 4 * footprint)))

    def resident(shape):
        nd = len(shape)
        return pl.BlockSpec(shape, lambda b, k, _nd=nd: (0,) * _nd)

    def streamed(shape):
        return pl.BlockSpec((1,) + tuple(shape[1:]), lambda b, k: (k, 0, 0))

    kernel = functools.partial(_fused_kernel, dil_unique=dil_unique, nb=NB,
                               seq_len=T, bblk=bblk, p_real=P)
    out = pl.pallas_call(
        kernel,
        out_shape=jax.ShapeDtypeStruct((batch * T, Pp), jnp.float32),
        grid=(steps, NB),
        in_specs=([pl.BlockSpec((n, L), lambda b, k: (b, 0))]
                  + [resident(tuple(kp[k].shape)) for k in _ENC_KEYS]
                  + [streamed(tuple(kp[k].shape)) for k in _BLK_KEYS]
                  + [pl.BlockSpec(memory_space=pltpu.MemorySpace.SMEM),
                     pl.BlockSpec(memory_space=pltpu.MemorySpace.SMEM)]),
        out_specs=pl.BlockSpec((n, Pp), lambda b, k: (b, 0)),
        scratch_shapes=[pltpu.VMEM((n, Pp), jnp.float32)],
        compiler_params=pltpu.CompilerParams(
            dimension_semantics=("parallel", "arbitrary"),
            vmem_limit_bytes=vmem_limit),
        cost_estimate=cost,
    )(patches, *[kp[k] for k in _ENC_KEYS], *[kp[k] for k in _BLK_KEYS],
      kp["prelu"], kp["dsel"])

    # lane-dense channels-last slab -> module's (B, P, T) layout (tiny glue op)
    out = out.reshape(batch, T, Pp)[:, :, :P]
    return jnp.transpose(out, (0, 2, 1))


# ---------------------------------------------------------------------------
# Deterministic synthetic parameters
# ---------------------------------------------------------------------------
def make_params(key, H, L, P, M, B, R):
    kit = iter(jax.random.split(key, 512))

    def nrm(shape, s=0.1):
        return (s * jax.random.normal(next(kit), shape)).astype(jnp.float32)

    def nrm_mxu(shape, s=0.1):
        # MXU-operand weights are made bf16-representable so the bf16 kernel
        # and the f32 reference consume numerically identical parameters.
        return nrm(shape, s).astype(jnp.bfloat16).astype(jnp.float32)

    def bn_fold(c):
        # TODO(synk): BatchNorm1d is implemented in inference mode (running
        # stats folded into scale/shift); train-mode batch stats not reproduced.
        gamma = 1.0 + nrm((1, c))
        beta = nrm((1, c))
        rmean = nrm((1, c))
        rvar = 1.0 + 0.1 * jax.random.uniform(next(kit), (1, c))
        s = gamma / jnp.sqrt(rvar + EPS_BN)
        t = beta - rmean * s
        return s.astype(jnp.float32), t.astype(jnp.float32)

    we = nrm_mxu((L, H))
    b_enc = nrm((1, H))
    s_enc, t_enc = bn_fold(H)
    encoder = dict(
        we=we,
        scale=s_enc,
        shift=s_enc * b_enc + t_enc,   # fold encoder conv bias into BN shift
        wb=nrm_mxu((H, P)),
        bb=nrm((1, P)),
    )

    Pr = max(P // 16, 1)               # SE reduction = 16
    blocks = []
    for _ in range(R):
        for xidx in range(B):
            d = 2 ** xidx
            s1, t1 = bn_fold(M)
            s2, t2 = bn_fold(M)
            p = dict(
                w1=nrm_mxu((P, M)), b1=nrm((1, M)),
                a1=jnp.full((1, 1), 0.25, jnp.float32), s1=s1, t1=t1,
                wdw=nrm((3, M)), bdw=nrm((1, M)),
                a2=jnp.full((1, 1), 0.25, jnp.float32), s2=s2, t2=t2,
                wp=nrm_mxu((M, P)), bp=nrm((1, P)),
                wf1=nrm_mxu((P, Pr)), bf1=nrm((1, Pr)),
                wf2=nrm_mxu((Pr, P)), bf2=nrm((1, P)),
            )
            blocks.append((p, d))
    return dict(encoder=encoder, blocks=blocks)


# ---------------------------------------------------------------------------
# Pure-JAX reference (same folded parameters) for verification
# ---------------------------------------------------------------------------
def ref_forward(x, params, L):
    stride = L // 2
    Bt, _, N = x.shape
    T = (N - L) // stride + 1
    idx = jnp.arange(T)[:, None] * stride + jnp.arange(L)[None, :]
    patches = x[:, 0, :][:, idx]
    enc = params["encoder"]
    hi = "highest"
    h = jnp.einsum("btl,lh->bth", patches, enc["we"], precision=hi)
    h = h * enc["scale"] + enc["shift"]
    h = jnp.maximum(h, 0.0)
    feat = jnp.einsum("bth,hp->btp", h, enc["wb"], precision=hi) + enc["bb"]
    for p, d in params["blocks"]:
        xin = feat
        h = jnp.einsum("btp,pm->btm", xin, p["w1"], precision=hi) + p["b1"]
        h = jnp.where(h > 0, h, p["a1"][0, 0] * h)
        h = h * p["s1"] + p["t1"]
        hp = jnp.pad(h, ((0, 0), (d, d), (0, 0)))
        hdw = (p["wdw"][0] * hp[:, 0:T, :]
               + p["wdw"][1] * hp[:, d:d + T, :]
               + p["wdw"][2] * hp[:, 2 * d:2 * d + T, :]) + p["bdw"]
        hdw = jnp.where(hdw > 0, hdw, p["a2"][0, 0] * hdw)
        hdw = hdw * p["s2"] + p["t2"]
        out = jnp.einsum("btm,mp->btp", hdw, p["wp"], precision=hi) + p["bp"]
        y = jnp.mean(out, axis=1, keepdims=True)
        y = jnp.einsum("btp,pr->btr", y, p["wf1"], precision=hi) + p["bf1"]
        y = jnp.maximum(y, 0.0)
        y = jnp.einsum("btr,rp->btp", y, p["wf2"], precision=hi) + p["bf2"]
        y = jax.nn.sigmoid(y)
        out = out * y
        feat = jnp.maximum(xin + out, 0.0)
    mean = jnp.mean(feat, axis=(1, 2), keepdims=True)
    var = jnp.mean((feat - mean) ** 2, axis=(1, 2), keepdims=True)
    feat = (feat - mean) * jax.lax.rsqrt(var + EPS_GLN)
    return jnp.transpose(feat, (0, 2, 1))


if __name__ == "__main__":
    # Small shapes consistent with FeatureExtraction(H, L, P, M, B, R)
    H, L, P, M, B, R = 32, 8, 16, 32, 2, 2
    batch, n_samples = 2, 132                     # T = (132 - 8)//4 + 1 = 32

    key = jax.random.PRNGKey(0)
    kx, kparam = jax.random.split(key)
    x = jax.random.normal(kx, (batch, 1, n_samples), dtype=jnp.float32)
    params = make_params(kparam, H, L, P, M, B, R)

    out = feature_extraction_forward(x, params, L)
    out = jax.block_until_ready(out)

    ref = ref_forward(x, params, L)
    assert out.shape == ref.shape == (batch, P, (n_samples - L) // (L // 2) + 1)
    err = float(jnp.max(jnp.abs(out - ref)))
    # bf16 MXU operands vs. float32-"highest" reference: allow bf16-level error.
    assert err < 1e-1, f"max abs err {err}"
    print("KERNEL_OK")
</pallas_src>

<mosaic_0001>
module attributes {stable_mosaic.version = 11 : i64} {
  func.func @_fused_kernel(%arg0: i32, %arg1: i32, %arg2: memref<32x8xf32, #tpu.memory_space<vmem>>, %arg3: memref<8x128xbf16, #tpu.memory_space<vmem>>, %arg4: memref<1x128xf32, #tpu.memory_space<vmem>>, %arg5: memref<1x128xf32, #tpu.memory_space<vmem>>, %arg6: memref<128x128xbf16, #tpu.memory_space<vmem>>, %arg7: memref<1x128xf32, #tpu.memory_space<vmem>>, %arg8: memref<1x128x128xbf16, #tpu.memory_space<vmem>>, %arg9: memref<1x1x128xf32, #tpu.memory_space<vmem>>, %arg10: memref<1x1x128xf32, #tpu.memory_space<vmem>>, %arg11: memref<1x1x128xf32, #tpu.memory_space<vmem>>, %arg12: memref<1x3x128xf32, #tpu.memory_space<vmem>>, %arg13: memref<1x1x128xf32, #tpu.memory_space<vmem>>, %arg14: memref<1x1x128xf32, #tpu.memory_space<vmem>>, %arg15: memref<1x1x128xf32, #tpu.memory_space<vmem>>, %arg16: memref<1x128x128xbf16, #tpu.memory_space<vmem>>, %arg17: memref<1x1x128xf32, #tpu.memory_space<vmem>>, %arg18: memref<1x128x8xbf16, #tpu.memory_space<vmem>>, %arg19: memref<1x1x8xf32, #tpu.memory_space<vmem>>, %arg20: memref<1x8x128xbf16, #tpu.memory_space<vmem>>, %arg21: memref<1x1x128xf32, #tpu.memory_space<vmem>>, %arg22: memref<8xf32, #tpu.memory_space<smem>>, %arg23: memref<4xi32, #tpu.memory_space<smem>>, %arg24: memref<32x128xf32, #tpu.memory_space<vmem>>, %arg25: memref<32x128xf32, #tpu.memory_space<vmem>>) attributes {dimension_semantics = [#tpu.dimension_semantics<parallel>, #tpu.dimension_semantics<arbitrary>], iteration_bounds = array<i64: 2, 4>, scalar_prefetch = 0 : i64, scratch_operands = 1 : i64, tpu.core_type = #tpu.core_type<tc>, window_params = [{transform_indices = @transform_0, window_bounds = array<i64: 32, 8>}, {pipeline_mode = #tpu.pipeline_mode<synchronous>, transform_indices = @transform_1, window_bounds = array<i64: 8, 128>}, {pipeline_mode = #tpu.pipeline_mode<synchronous>, transform_indices = @transform_2, window_bounds = array<i64: 1, 128>}, {pipeline_mode = #tpu.pipeline_mode<synchronous>, transform_indices = @transform_3, window_bounds = array<i64: 1, 128>}, {pipeline_mode = #tpu.pipeline_mode<synchronous>, transform_indices = @transform_4, window_bounds = array<i64: 128, 128>}, {pipeline_mode = #tpu.pipeline_mode<synchronous>, transform_indices = @transform_5, window_bounds = array<i64: 1, 128>}, {transform_indices = @transform_6, window_bounds = array<i64: 1, 128, 128>}, {transform_indices = @transform_7, window_bounds = array<i64: 1, 1, 128>}, {transform_indices = @transform_8, window_bounds = array<i64: 1, 1, 128>}, {transform_indices = @transform_9, window_bounds = array<i64: 1, 1, 128>}, {transform_indices = @transform_10, window_bounds = array<i64: 1, 3, 128>}, {transform_indices = @transform_11, window_bounds = array<i64: 1, 1, 128>}, {transform_indices = @transform_12, window_bounds = array<i64: 1, 1, 128>}, {transform_indices = @transform_13, window_bounds = array<i64: 1, 1, 128>}, {transform_indices = @transform_14, window_bounds = array<i64: 1, 128, 128>}, {transform_indices = @transform_15, window_bounds = array<i64: 1, 1, 128>}, {transform_indices = @transform_16, window_bounds = array<i64: 1, 128, 8>}, {transform_indices = @transform_17, window_bounds = array<i64: 1, 1, 8>}, {transform_indices = @transform_18, window_bounds = array<i64: 1, 8, 128>}, {transform_indices = @transform_19, window_bounds = array<i64: 1, 1, 128>}, {transform_indices = @transform_20, window_bounds = array<i64: 8>}, {transform_indices = @transform_21, window_bounds = array<i64: 4>}, {transform_indices = @transform_22, window_bounds = array<i64: 32, 128>}]} {
    %0 = tpu.iota {dimensions = array<i32: 0>} : vector<32x1xi32>
    %c32_i32 = arith.constant 32 : i32
    %c0_i32 = arith.constant 0 : i32
    %1 = arith.cmpi eq, %c32_i32, %c0_i32 : i32
    %c1_i32 = arith.constant 1 : i32
    %2 = arith.select %1, %c1_i32, %c32_i32 : i32
    %3 = vector.broadcast %2 : i32 to vector<32x1xi32>
    %4 = arith.remsi %0, %3 : vector<32x1xi32>
    %c0_i32_0 = arith.constant 0 : i32
    %5 = vector.broadcast %c0_i32_0 : i32 to vector<32x1xi32>
    %6 = arith.cmpi ne, %4, %5 : vector<32x1xi32>
    %c0_i32_1 = arith.constant 0 : i32
    %7 = vector.broadcast %c0_i32_1 : i32 to vector<32x1xi32>
    %8 = arith.cmpi slt, %4, %7 : vector<32x1xi32>
    %c0_i32_2 = arith.constant 0 : i32
    %9 = arith.cmpi slt, %2, %c0_i32_2 : i32
    %10 = vector.broadcast %9 : i1 to vector<32x1xi1>
    %11 = vector.broadcast %10 : vector<32x1xi1> to vector<32x1xi1>
    %12 = arith.xori %8, %11 : vector<32x1xi1>
    %13 = arith.andi %12, %6 : vector<32x1xi1>
    %14 = vector.broadcast %2 : i32 to vector<32x1xi32>
    %15 = arith.addi %4, %14 : vector<32x1xi32>
    %16 = arith.select %13, %15, %4 : vector<32x1xi1>, vector<32x1xi32>
    %c0_i32_3 = arith.constant 0 : i32
    %17 = arith.cmpi eq, %arg1, %c0_i32_3 : i32
    %18 = arith.extui %17 : i1 to i32
    %c0_i32_4 = arith.constant 0 : i32
    %19 = arith.cmpi ne, %18, %c0_i32_4 : i32
    scf.if %19 {
      %c0_77 = arith.constant 0 : index
      %c0_78 = arith.constant 0 : index
      %173 = vector.load %arg2[%c0_77, %c0_78] : memref<32x8xf32, #tpu.memory_space<vmem>>, vector<32x8xf32>
      %174 = arith.truncf %173 : vector<32x8xf32> to vector<32x8xbf16>
      %c0_79 = arith.constant 0 : index
      %c0_80 = arith.constant 0 : index
      %175 = vector.load %arg3[%c0_79, %c0_80] : memref<8x128xbf16, #tpu.memory_space<vmem>>, vector<8x128xbf16>
      %cst_81 = arith.constant dense<0.000000e+00> : vector<32x128xf32>
      %176 = tpu.matmul %174, %175, %cst_81 {dimension_numbers = #tpu.dot_dimension_numbers<[1], [0], [0], [1], [0, 0, 1, 1], [], []>} : vector<32x8xbf16>, vector<8x128xbf16>, vector<32x128xf32> -> vector<32x128xf32>
      %c0_82 = arith.constant 0 : index
      %c0_83 = arith.constant 0 : index
      %177 = vector.load %arg4[%c0_82, %c0_83] : memref<1x128xf32, #tpu.memory_space<vmem>>, vector<1x128xf32>
      %178 = vector.broadcast %177 : vector<1x128xf32> to vector<32x128xf32>
      %179 = arith.mulf %176, %178 : vector<32x128xf32>
      %c0_84 = arith.constant 0 : index
      %c0_85 = arith.constant 0 : index
      %180 = vector.load %arg5[%c0_84, %c0_85] : memref<1x128xf32, #tpu.memory_space<vmem>>, vector<1x128xf32>
      %181 = vector.broadcast %180 : vector<1x128xf32> to vector<32x128xf32>
      %182 = arith.addf %179, %181 : vector<32x128xf32>
      %cst_86 = arith.constant 0.000000e+00 : f32
      %183 = vector.broadcast %cst_86 : f32 to vector<32x128xf32>
      %184 = arith.maximumf %182, %183 : vector<32x128xf32>
      %185 = arith.truncf %184 : vector<32x128xf32> to vector<32x128xbf16>
      %c0_87 = arith.constant 0 : index
      %c0_88 = arith.constant 0 : index
      %186 = vector.load %arg6[%c0_87, %c0_88] : memref<128x128xbf16, #tpu.memory_space<vmem>>, vector<128x128xbf16>
      %cst_89 = arith.constant dense<0.000000e+00> : vector<32x128xf32>
      %187 = tpu.matmul %185, %186, %cst_89 {dimension_numbers = #tpu.dot_dimension_numbers<[1], [0], [0], [1], [0, 0, 1, 1], [], []>} : vector<32x128xbf16>, vector<128x128xbf16>, vector<32x128xf32> -> vector<32x128xf32>
      %c0_90 = arith.constant 0 : index
      %c0_91 = arith.constant 0 : index
      %188 = vector.load %arg7[%c0_90, %c0_91] : memref<1x128xf32, #tpu.memory_space<vmem>>, vector<1x128xf32>
      %189 = vector.broadcast %188 : vector<1x128xf32> to vector<32x128xf32>
      %190 = arith.addf %187, %189 : vector<32x128xf32>
      %c0_92 = arith.constant 0 : index
      %c0_93 = arith.constant 0 : index
      %191 = vector.load %arg25[%c0_92, %c0_93] : memref<32x128xf32, #tpu.memory_space<vmem>>, vector<32x128xf32>
      tpu.vector_store %arg25[%c0_92, %c0_93], %190 {strides = array<i32>} : memref<32x128xf32, #tpu.memory_space<vmem>>, vector<32x128xf32>,
    } else {
    }
    %c0 = arith.constant 0 : index
    %c0_5 = arith.constant 0 : index
    %20 = vector.load %arg25[%c0, %c0_5] : memref<32x128xf32, #tpu.memory_space<vmem>>, vector<32x128xf32>
    %c2_i32 = arith.constant 2 : i32
    %21 = arith.muli %c2_i32, %arg1 : i32
    %22 = arith.index_cast %21 : i32 to index
    %23 = memref.load %arg22[%22] : memref<8xf32, #tpu.memory_space<smem>>
    %c2_i32_6 = arith.constant 2 : i32
    %24 = arith.muli %c2_i32_6, %arg1 : i32
    %c1_i32_7 = arith.constant 1 : i32
    %25 = arith.addi %24, %c1_i32_7 : i32
    %26 = arith.index_cast %25 : i32 to index
    %27 = memref.load %arg22[%26] : memref<8xf32, #tpu.memory_space<smem>>
    %28 = arith.truncf %20 : vector<32x128xf32> to vector<32x128xbf16>
    %c0_8 = arith.constant 0 : index
    %c0_9 = arith.constant 0 : index
    %c0_10 = arith.constant 0 : index
    %29 = vector.load %arg8[%c0_8, %c0_9, %c0_10] : memref<1x128x128xbf16, #tpu.memory_space<vmem>>, vector<1x128x128xbf16>
    %30 = vector.shape_cast %29 : vector<1x128x128xbf16> to vector<128x128xbf16>
    %cst = arith.constant dense<0.000000e+00> : vector<32x128xf32>
    %31 = tpu.matmul %28, %30, %cst {dimension_numbers = #tpu.dot_dimension_numbers<[1], [0], [0], [1], [0, 0, 1, 1], [], []>} : vector<32x128xbf16>, vector<128x128xbf16>, vector<32x128xf32> -> vector<32x128xf32>
    %c0_11 = arith.constant 0 : index
    %c0_12 = arith.constant 0 : index
    %c0_13 = arith.constant 0 : index
    %32 = vector.load %arg9[%c0_11, %c0_12, %c0_13] : memref<1x1x128xf32, #tpu.memory_space<vmem>>, vector<1x1x128xf32>
    %33 = vector.shape_cast %32 : vector<1x1x128xf32> to vector<1x128xf32>
    %34 = vector.broadcast %33 : vector<1x128xf32> to vector<32x128xf32>
    %35 = arith.addf %31, %34 : vector<32x128xf32>
    %cst_14 = arith.constant 0.000000e+00 : f32
    %36 = vector.broadcast %cst_14 : f32 to vector<32x128xf32>
    %37 = arith.cmpf ogt, %35, %36 : vector<32x128xf32>
    %38 = vector.broadcast %23 : f32 to vector<32x128xf32>
    %39 = arith.mulf %38, %35 : vector<32x128xf32>
    %40 = arith.select %37, %35, %39 : vector<32x128xi1>, vector<32x128xf32>
    %c0_15 = arith.constant 0 : index
    %c0_16 = arith.constant 0 : index
    %c0_17 = arith.constant 0 : index
    %41 = vector.load %arg10[%c0_15, %c0_16, %c0_17] : memref<1x1x128xf32, #tpu.memory_space<vmem>>, vector<1x1x128xf32>
    %42 = vector.shape_cast %41 : vector<1x1x128xf32> to vector<1x128xf32>
    %43 = vector.broadcast %42 : vector<1x128xf32> to vector<32x128xf32>
    %44 = arith.mulf %40, %43 : vector<32x128xf32>
    %c0_18 = arith.constant 0 : index
    %c0_19 = arith.constant 0 : index
    %c0_20 = arith.constant 0 : index
    %45 = vector.load %arg11[%c0_18, %c0_19, %c0_20] : memref<1x1x128xf32, #tpu.memory_space<vmem>>, vector<1x1x128xf32>
    %46 = vector.shape_cast %45 : vector<1x1x128xf32> to vector<1x128xf32>
    %47 = vector.broadcast %46 : vector<1x128xf32> to vector<32x128xf32>
    %48 = arith.addf %44, %47 : vector<32x128xf32>
    %49 = arith.index_cast %arg1 : i32 to index
    %50 = memref.load %arg23[%49] : memref<4xi32, #tpu.memory_space<smem>>
    %c0_21 = arith.constant 0 : index
    %c0_22 = arith.constant 0 : index
    %c0_23 = arith.constant 0 : index
    %51 = vector.load %arg12[%c0_21, %c0_22, %c0_23] : memref<1x3x128xf32, #tpu.memory_space<vmem>>, vector<1x3x128xf32>
    %52 = vector.shape_cast %51 : vector<1x3x128xf32> to vector<3x128xf32>
    %cst_24 = arith.constant 0.000000e+00 : f32
    %53 = vector.broadcast %cst_24 : f32 to vector<32x128xf32>
    %cst_25 = arith.constant 0.000000e+00 : f32
    %54 = vector.broadcast %cst_25 : f32 to vector<32x128xf32>
    %c0_i32_26 = arith.constant 0 : i32
    %55 = arith.cmpi eq, %50, %c0_i32_26 : i32
    %56 = arith.extui %55 : i1 to i32
    %57 = arith.sitofp %56 : i32 to f32
    %c1_i32_27 = arith.constant 1 : i32
    %58 = vector.broadcast %c1_i32_27 : i32 to vector<32x1xi32>
    %59 = arith.cmpi sge, %16, %58 : vector<32x1xi32>
    %c1_i32_28 = arith.constant 1 : i32
    %60 = tpu.dynamic_rotate %48 by %c1_i32_28 dim 0 : vector<32x128xf32>, i32 -> vector<32x128xf32>
    %cst_29 = arith.constant 0.000000e+00 : f32
    %61 = vector.shape_cast %59 : vector<32x1xi1> to vector<32x1xi1>
    %62 = vector.broadcast %61 : vector<32x1xi1> to vector<32x128xi1>
    %63 = vector.broadcast %cst_29 : f32 to vector<32x128xf32>
    %64 = arith.select %62, %60, %63 : vector<32x128xi1>, vector<32x128xf32>
    %c31_i32 = arith.constant 31 : i32
    %65 = vector.broadcast %c31_i32 : i32 to vector<32x1xi32>
    %66 = arith.cmpi slt, %16, %65 : vector<32x1xi32>
    %c31_i32_30 = arith.constant 31 : i32
    %67 = tpu.dynamic_rotate %48 by %c31_i32_30 dim 0 : vector<32x128xf32>, i32 -> vector<32x128xf32>
    %cst_31 = arith.constant 0.000000e+00 : f32
    %68 = vector.shape_cast %66 : vector<32x1xi1> to vector<32x1xi1>
    %69 = vector.broadcast %68 : vector<32x1xi1> to vector<32x128xi1>
    %70 = vector.broadcast %cst_31 : f32 to vector<32x128xf32>
    %71 = arith.select %69, %67, %70 : vector<32x128xi1>, vector<32x128xf32>
    %72 = vector.broadcast %57 : f32 to vector<32x128xf32>
    %73 = arith.mulf %72, %64 : vector<32x128xf32>
    %74 = arith.addf %53, %73 : vector<32x128xf32>
    %75 = vector.broadcast %57 : f32 to vector<32x128xf32>
    %76 = arith.mulf %75, %71 : vector<32x128xf32>
    %77 = arith.addf %54, %76 : vector<32x128xf32>
    %c1_i32_32 = arith.constant 1 : i32
    %78 = arith.cmpi eq, %50, %c1_i32_32 : i32
    %79 = arith.extui %78 : i1 to i32
    %80 = arith.sitofp %79 : i32 to f32
    %c2_i32_33 = arith.constant 2 : i32
    %81 = vector.broadcast %c2_i32_33 : i32 to vector<32x1xi32>
    %82 = arith.cmpi sge, %16, %81 : vector<32x1xi32>
    %c2_i32_34 = arith.constant 2 : i32
    %83 = tpu.dynamic_rotate %48 by %c2_i32_34 dim 0 : vector<32x128xf32>, i32 -> vector<32x128xf32>
    %cst_35 = arith.constant 0.000000e+00 : f32
    %84 = vector.shape_cast %82 : vector<32x1xi1> to vector<32x1xi1>
    %85 = vector.broadcast %84 : vector<32x1xi1> to vector<32x128xi1>
    %86 = vector.broadcast %cst_35 : f32 to vector<32x128xf32>
    %87 = arith.select %85, %83, %86 : vector<32x128xi1>, vector<32x128xf32>
    %c30_i32 = arith.constant 30 : i32
    %88 = vector.broadcast %c30_i32 : i32 to vector<32x1xi32>
    %89 = arith.cmpi slt, %16, %88 : vector<32x1xi32>
    %c30_i32_36 = arith.constant 30 : i32
    %90 = tpu.dynamic_rotate %48 by %c30_i32_36 dim 0 : vector<32x128xf32>, i32 -> vector<32x128xf32>
    %cst_37 = arith.constant 0.000000e+00 : f32
    %91 = vector.shape_cast %89 : vector<32x1xi1> to vector<32x1xi1>
    %92 = vector.broadcast %91 : vector<32x1xi1> to vector<32x128xi1>
    %93 = vector.broadcast %cst_37 : f32 to vector<32x128xf32>
    %94 = arith.select %92, %90, %93 : vector<32x128xi1>, vector<32x128xf32>
    %95 = vector.broadcast %80 : f32 to vector<32x128xf32>
    %96 = arith.mulf %95, %87 : vector<32x128xf32>
    %97 = arith.addf %74, %96 : vector<32x128xf32>
    %98 = vector.broadcast %80 : f32 to vector<32x128xf32>
    %99 = arith.mulf %98, %94 : vector<32x128xf32>
    %100 = arith.addf %77, %99 : vector<32x128xf32>
    %101 = vector.extract_strided_slice %52 {offsets = [0, 0], sizes = [1, 128], strides = [1, 1]} : vector<3x128xf32> to vector<1x128xf32>
    %102 = vector.broadcast %101 : vector<1x128xf32> to vector<32x128xf32>
    %103 = arith.mulf %102, %97 : vector<32x128xf32>
    %104 = vector.extract_strided_slice %52 {offsets = [1, 0], sizes = [1, 128], strides = [1, 1]} : vector<3x128xf32> to vector<1x128xf32>
    %105 = vector.broadcast %104 : vector<1x128xf32> to vector<32x128xf32>
    %106 = arith.mulf %105, %48 : vector<32x128xf32>
    %107 = arith.addf %103, %106 : vector<32x128xf32>
    %108 = vector.extract_strided_slice %52 {offsets = [2, 0], sizes = [1, 128], strides = [1, 1]} : vector<3x128xf32> to vector<1x128xf32>
    %109 = vector.broadcast %108 : vector<1x128xf32> to vector<32x128xf32>
    %110 = arith.mulf %109, %100 : vector<32x128xf32>
    %111 = arith.addf %107, %110 : vector<32x128xf32>
    %c0_38 = arith.constant 0 : index
    %c0_39 = arith.constant 0 : index
    %c0_40 = arith.constant 0 : index
    %112 = vector.load %arg13[%c0_38, %c0_39, %c0_40] : memref<1x1x128xf32, #tpu.memory_space<vmem>>, vector<1x1x128xf32>
    %113 = vector.shape_cast %112 : vector<1x1x128xf32> to vector<1x128xf32>
    %114 = vector.broadcast %113 : vector<1x128xf32> to vector<32x128xf32>
    %115 = arith.addf %111, %114 : vector<32x128xf32>
    %cst_41 = arith.constant 0.000000e+00 : f32
    %116 = vector.broadcast %cst_41 : f32 to vector<32x128xf32>
    %117 = arith.cmpf ogt, %115, %116 : vector<32x128xf32>
    %118 = vector.broadcast %27 : f32 to vector<32x128xf32>
    %119 = arith.mulf %118, %115 : vector<32x128xf32>
    %120 = arith.select %117, %115, %119 : vector<32x128xi1>, vector<32x128xf32>
    %c0_42 = arith.constant 0 : index
    %c0_43 = arith.constant 0 : index
    %c0_44 = arith.constant 0 : index
    %121 = vector.load %arg14[%c0_42, %c0_43, %c0_44] : memref<1x1x128xf32, #tpu.memory_space<vmem>>, vector<1x1x128xf32>
    %122 = vector.shape_cast %121 : vector<1x1x128xf32> to vector<1x128xf32>
    %123 = vector.broadcast %122 : vector<1x128xf32> to vector<32x128xf32>
    %124 = arith.mulf %120, %123 : vector<32x128xf32>
    %c0_45 = arith.constant 0 : index
    %c0_46 = arith.constant 0 : index
    %c0_47 = arith.constant 0 : index
    %125 = vector.load %arg15[%c0_45, %c0_46, %c0_47] : memref<1x1x128xf32, #tpu.memory_space<vmem>>, vector<1x1x128xf32>
    %126 = vector.shape_cast %125 : vector<1x1x128xf32> to vector<1x128xf32>
    %127 = vector.broadcast %126 : vector<1x128xf32> to vector<32x128xf32>
    %128 = arith.addf %124, %127 : vector<32x128xf32>
    %129 = arith.truncf %128 : vector<32x128xf32> to vector<32x128xbf16>
    %c0_48 = arith.constant 0 : index
    %c0_49 = arith.constant 0 : index
    %c0_50 = arith.constant 0 : index
    %130 = vector.load %arg16[%c0_48, %c0_49, %c0_50] : memref<1x128x128xbf16, #tpu.memory_space<vmem>>, vector<1x128x128xbf16>
    %131 = vector.shape_cast %130 : vector<1x128x128xbf16> to vector<128x128xbf16>
    %cst_51 = arith.constant dense<0.000000e+00> : vector<32x128xf32>
    %132 = tpu.matmul %129, %131, %cst_51 {dimension_numbers = #tpu.dot_dimension_numbers<[1], [0], [0], [1], [0, 0, 1, 1], [], []>} : vector<32x128xbf16>, vector<128x128xbf16>, vector<32x128xf32> -> vector<32x128xf32>
    %c0_52 = arith.constant 0 : index
    %c0_53 = arith.constant 0 : index
    %c0_54 = arith.constant 0 : index
    %133 = vector.load %arg17[%c0_52, %c0_53, %c0_54] : memref<1x1x128xf32, #tpu.memory_space<vmem>>, vector<1x1x128xf32>
    %134 = vector.shape_cast %133 : vector<1x1x128xf32> to vector<1x128xf32>
    %135 = vector.broadcast %134 : vector<1x128xf32> to vector<32x128xf32>
    %136 = arith.addf %132, %135 : vector<32x128xf32>
    %137 = vector.shape_cast %136 : vector<32x128xf32> to vector<1x32x128xf32>
    %cst_55 = arith.constant dense<0.000000e+00> : vector<1x128xf32>
    %138 = vector.multi_reduction <add>, %137, %cst_55 [1] : vector<1x32x128xf32> to vector<1x128xf32>
    %cst_56 = arith.constant 3.200000e+01 : f32
    %139 = vector.broadcast %cst_56 : f32 to vector<1x128xf32>
    %140 = arith.divf %138, %139 : vector<1x128xf32>
    %141 = arith.truncf %140 : vector<1x128xf32> to vector<1x128xbf16>
    %c0_57 = arith.constant 0 : index
    %c0_58 = arith.constant 0 : index
    %c0_59 = arith.constant 0 : index
    %142 = vector.load %arg18[%c0_57, %c0_58, %c0_59] : memref<1x128x8xbf16, #tpu.memory_space<vmem>>, vector<1x128x8xbf16>
    %143 = vector.shape_cast %142 : vector<1x128x8xbf16> to vector<128x8xbf16>
    %cst_60 = arith.constant dense<0.000000e+00> : vector<1x8xf32>
    %144 = tpu.matmul %141, %143, %cst_60 {dimension_numbers = #tpu.dot_dimension_numbers<[1], [0], [0], [1], [0, 0, 1, 1], [], []>} : vector<1x128xbf16>, vector<128x8xbf16>, vector<1x8xf32> -> vector<1x8xf32>
    %c0_61 = arith.constant 0 : index
    %c0_62 = arith.constant 0 : index
    %c0_63 = arith.constant 0 : index
    %145 = vector.load %arg19[%c0_61, %c0_62, %c0_63] : memref<1x1x8xf32, #tpu.memory_space<vmem>>, vector<1x1x8xf32>
    %146 = vector.shape_cast %145 : vector<1x1x8xf32> to vector<1x8xf32>
    %147 = arith.addf %144, %146 : vector<1x8xf32>
    %cst_64 = arith.constant 0.000000e+00 : f32
    %148 = vector.broadcast %cst_64 : f32 to vector<1x8xf32>
    %149 = arith.maximumf %147, %148 : vector<1x8xf32>
    %150 = arith.truncf %149 : vector<1x8xf32> to vector<1x8xbf16>
    %c0_65 = arith.constant 0 : index
    %c0_66 = arith.constant 0 : index
    %c0_67 = arith.constant 0 : index
    %151 = vector.load %arg20[%c0_65, %c0_66, %c0_67] : memref<1x8x128xbf16, #tpu.memory_space<vmem>>, vector<1x8x128xbf16>
    %152 = vector.shape_cast %151 : vector<1x8x128xbf16> to vector<8x128xbf16>
    %cst_68 = arith.constant dense<0.000000e+00> : vector<1x128xf32>
    %153 = tpu.matmul %150, %152, %cst_68 {dimension_numbers = #tpu.dot_dimension_numbers<[1], [0], [0], [1], [0, 0, 1, 1], [], []>} : vector<1x8xbf16>, vector<8x128xbf16>, vector<1x128xf32> -> vector<1x128xf32>
    %c0_69 = arith.constant 0 : index
    %c0_70 = arith.constant 0 : index
    %c0_71 = arith.constant 0 : index
    %154 = vector.load %arg21[%c0_69, %c0_70, %c0_71] : memref<1x1x128xf32, #tpu.memory_space<vmem>>, vector<1x1x128xf32>
    %155 = vector.shape_cast %154 : vector<1x1x128xf32> to vector<1x128xf32>
    %156 = arith.addf %153, %155 : vector<1x128xf32>
    %157 = arith.negf %156 : vector<1x128xf32>
    %158 = math.exp %157 : vector<1x128xf32>
    %cst_72 = arith.constant 1.000000e+00 : f32
    %159 = vector.broadcast %cst_72 : f32 to vector<1x128xf32>
    %160 = arith.addf %159, %158 : vector<1x128xf32>
    %161 = arith.divf %159, %160 : vector<1x128xf32>
    %162 = vector.shape_cast %161 : vector<1x128xf32> to vector<1x1x128xf32>
    %163 = vector.broadcast %162 : vector<1x1x128xf32> to vector<1x32x128xf32>
    %164 = arith.mulf %137, %163 : vector<1x32x128xf32>
    %165 = vector.shape_cast %164 : vector<1x32x128xf32> to vector<32x128xf32>
    %166 = arith.addf %20, %165 : vector<32x128xf32>
    %cst_73 = arith.constant 0.000000e+00 : f32
    %167 = vector.broadcast %cst_73 : f32 to vector<32x128xf32>
    %168 = arith.maximumf %166, %167 : vector<32x128xf32>
    %c0_74 = arith.constant 0 : index
    %c0_75 = arith.constant 0 : index
    %169 = vector.load %arg25[%c0_74, %c0_75] : memref<32x128xf32, #tpu.memory_space<vmem>>, vector<32x128xf32>
    tpu.vector_store %arg25[%c0_74, %c0_75], %168 {strides = array<i32>} : memref<32x128xf32, #tpu.memory_space<vmem>>, vector<32x128xf32>,
    %c3_i32 = arith.constant 3 : i32
    %170 = arith.cmpi eq, %arg1, %c3_i32 : i32
    %171 = arith.extui %170 : i1 to i32
    %c0_i32_76 = arith.constant 0 : i32
    %172 = arith.cmpi ne, %171, %c0_i32_76 : i32
    scf.if %172 {
      %173 = vector.shape_cast %168 : vector<32x128xf32> to vector<1x32x128xf32>
      %174 = tpu.iota {dimensions = array<i32: 2>} : vector<1x1x128xi32>
      %c16_i32 = arith.constant 16 : i32
      %175 = vector.broadcast %c16_i32 : i32 to vector<1x1x128xi32>
      %176 = arith.cmpi slt, %174, %175 : vector<1x1x128xi32>
      %177 = arith.extui %176 : vector<1x1x128xi1> to vector<1x1x128xi32>
      %178 = arith.sitofp %177 : vector<1x1x128xi32> to vector<1x1x128xf32>
      %cst_77 = arith.constant dense<0.000000e+00> : vector<1x32xf32>
      %179 = vector.multi_reduction <add>, %173, %cst_77 [2] : vector<1x32x128xf32> to vector<1x32xf32>
      %180 = vector.shape_cast %179 : vector<1x32xf32> to vector<1x32x1xf32>
      %cst_78 = arith.constant dense<0.000000e+00> : vector<1x1xf32>
      %181 = vector.multi_reduction <add>, %180, %cst_78 [1] : vector<1x32x1xf32> to vector<1x1xf32>
      %182 = vector.shape_cast %181 : vector<1x1xf32> to vector<1x1x1xf32>
      %cst_79 = arith.constant 0.001953125 : f32
      %183 = vector.broadcast %cst_79 : f32 to vector<1x1x1xf32>
      %184 = arith.mulf %182, %183 : vector<1x1x1xf32>
      %185 = vector.broadcast %184 : vector<1x1x1xf32> to vector<1x32x128xf32>
      %186 = arith.subf %173, %185 : vector<1x32x128xf32>
      %187 = vector.broadcast %178 : vector<1x1x128xf32> to vector<1x32x128xf32>
      %188 = arith.mulf %186, %187 : vector<1x32x128xf32>
      %189 = arith.mulf %188, %188 : vector<1x32x128xf32>
      %cst_80 = arith.constant dense<0.000000e+00> : vector<1x32xf32>
      %190 = vector.multi_reduction <add>, %189, %cst_80 [2] : vector<1x32x128xf32> to vector<1x32xf32>
      %191 = vector.shape_cast %190 : vector<1x32xf32> to vector<1x32x1xf32>
      %cst_81 = arith.constant dense<0.000000e+00> : vector<1x1xf32>
      %192 = vector.multi_reduction <add>, %191, %cst_81 [1] : vector<1x32x1xf32> to vector<1x1xf32>
      %193 = vector.shape_cast %192 : vector<1x1xf32> to vector<1x1x1xf32>
      %cst_82 = arith.constant 0.001953125 : f32
      %194 = vector.broadcast %cst_82 : f32 to vector<1x1x1xf32>
      %195 = arith.mulf %193, %194 : vector<1x1x1xf32>
      %cst_83 = arith.constant 9.99999974E-6 : f32
      %196 = vector.broadcast %cst_83 : f32 to vector<1x1x1xf32>
      %197 = arith.addf %195, %196 : vector<1x1x1xf32>
      %198 = math.rsqrt %197 : vector<1x1x1xf32>
      %199 = vector.broadcast %198 : vector<1x1x1xf32> to vector<1x32x128xf32>
      %200 = arith.mulf %188, %199 : vector<1x32x128xf32>
      %201 = vector.shape_cast %200 : vector<1x32x128xf32> to vector<32x128xf32>
      %c0_84 = arith.constant 0 : index
      %c0_85 = arith.constant 0 : index
      %202 = vector.load %arg24[%c0_84, %c0_85] : memref<32x128xf32, #tpu.memory_space<vmem>>, vector<32x128xf32>
      tpu.vector_store %arg24[%c0_84, %c0_85], %201 {strides = array<i32>} : memref<32x128xf32, #tpu.memory_space<vmem>>, vector<32x128xf32>,
    } else {
    }
    return
  }
  func.func @transform_0(%arg0: i32, %arg1: i32) -> (i32, i32) {
    %c0_i32 = arith.constant 0 : i32
    %c0_i32_0 = arith.constant 0 : i32
    return %arg0, %c0_i32 : i32, i32
  }
  func.func @transform_1(%arg0: i32, %arg1: i32) -> (i32, i32) {
    %c0_i32 = arith.constant 0 : i32
    %c0_i32_0 = arith.constant 0 : i32
    %c0_i32_1 = arith.constant 0 : i32
    return %c0_i32, %c0_i32_0 : i32, i32
  }
  func.func @transform_2(%arg0: i32, %arg1: i32) -> (i32, i32) {
    %c0_i32 = arith.constant 0 : i32
    %c0_i32_0 = arith.constant 0 : i32
    %c0_i32_1 = arith.constant 0 : i32
    return %c0_i32, %c0_i32_0 : i32, i32
  }
  func.func @transform_3(%arg0: i32, %arg1: i32) -> (i32, i32) {
    %c0_i32 = arith.constant 0 : i32
    %c0_i32_0 = arith.constant 0 : i32
    %c0_i32_1 = arith.constant 0 : i32
    return %c0_i32, %c0_i32_0 : i32, i32
  }
  func.func @transform_4(%arg0: i32, %arg1: i32) -> (i32, i32) {
    %c0_i32 = arith.constant 0 : i32
    %c0_i32_0 = arith.constant 0 : i32
    %c0_i32_1 = arith.constant 0 : i32
    return %c0_i32, %c0_i32_0 : i32, i32
  }
  func.func @transform_5(%arg0: i32, %arg1: i32) -> (i32, i32) {
    %c0_i32 = arith.constant 0 : i32
    %c0_i32_0 = arith.constant 0 : i32
    %c0_i32_1 = arith.constant 0 : i32
    return %c0_i32, %c0_i32_0 : i32, i32
  }
  func.func @transform_6(%arg0: i32, %arg1: i32) -> (i32, i32, i32) {
    %c0_i32 = arith.constant 0 : i32
    %c0_i32_0 = arith.constant 0 : i32
    %c0_i32_1 = arith.constant 0 : i32
    return %arg1, %c0_i32, %c0_i32_0 : i32, i32, i32
  }
  func.func @transform_7(%arg0: i32, %arg1: i32) -> (i32, i32, i32) {
    %c0_i32 = arith.constant 0 : i32
    %c0_i32_0 = arith.constant 0 : i32
    %c0_i32_1 = arith.constant 0 : i32
    return %arg1, %c0_i32, %c0_i32_0 : i32, i32, i32
  }
  func.func @transform_8(%arg0: i32, %arg1: i32) -> (i32, i32, i32) {
    %c0_i32 = arith.constant 0 : i32
    %c0_i32_0 = arith.constant 0 : i32
    %c0_i32_1 = arith.constant 0 : i32
    return %arg1, %c0_i32, %c0_i32_0 : i32, i32, i32
  }
  func.func @transform_9(%arg0: i32, %arg1: i32) -> (i32, i32, i32) {
    %c0_i32 = arith.constant 0 : i32
    %c0_i32_0 = arith.constant 0 : i32
    %c0_i32_1 = arith.constant 0 : i32
    return %arg1, %c0_i32, %c0_i32_0 : i32, i32, i32
  }
  func.func @transform_10(%arg0: i32, %arg1: i32) -> (i32, i32, i32) {
    %c0_i32 = arith.constant 0 : i32
    %c0_i32_0 = arith.constant 0 : i32
    %c0_i32_1 = arith.constant 0 : i32
    return %arg1, %c0_i32, %c0_i32_0 : i32, i32, i32
  }
  func.func @transform_11(%arg0: i32, %arg1: i32) -> (i32, i32, i32) {
    %c0_i32 = arith.constant 0 : i32
    %c0_i32_0 = arith.constant 0 : i32
    %c0_i32_1 = arith.constant 0 : i32
    return %arg1, %c0_i32, %c0_i32_0 : i32, i32, i32
  }
  func.func @transform_12(%arg0: i32, %arg1: i32) -> (i32, i32, i32) {
    %c0_i32 = arith.constant 0 : i32
    %c0_i32_0 = arith.constant 0 : i32
    %c0_i32_1 = arith.constant 0 : i32
    return %arg1, %c0_i32, %c0_i32_0 : i32, i32, i32
  }
  func.func @transform_13(%arg0: i32, %arg1: i32) -> (i32, i32, i32) {
    %c0_i32 = arith.constant 0 : i32
    %c0_i32_0 = arith.constant 0 : i32
    %c0_i32_1 = arith.constant 0 : i32
    return %arg1, %c0_i32, %c0_i32_0 : i32, i32, i32
  }
  func.func @transform_14(%arg0: i32, %arg1: i32) -> (i32, i32, i32) {
    %c0_i32 = arith.constant 0 : i32
    %c0_i32_0 = arith.constant 0 : i32
    %c0_i32_1 = arith.constant 0 : i32
    return %arg1, %c0_i32, %c0_i32_0 : i32, i32, i32
  }
  func.func @transform_15(%arg0: i32, %arg1: i32) -> (i32, i32, i32) {
    %c0_i32 = arith.constant 0 : i32
    %c0_i32_0 = arith.constant 0 : i32
    %c0_i32_1 = arith.constant 0 : i32
    return %arg1, %c0_i32, %c0_i32_0 : i32, i32, i32
  }
  func.func @transform_16(%arg0: i32, %arg1: i32) -> (i32, i32, i32) {
    %c0_i32 = arith.constant 0 : i32
    %c0_i32_0 = arith.constant 0 : i32
    %c0_i32_1 = arith.constant 0 : i32
    return %arg1, %c0_i32, %c0_i32_0 : i32, i32, i32
  }
  func.func @transform_17(%arg0: i32, %arg1: i32) -> (i32, i32, i32) {
    %c0_i32 = arith.constant 0 : i32
    %c0_i32_0 = arith.constant 0 : i32
    %c0_i32_1 = arith.constant 0 : i32
    return %arg1, %c0_i32, %c0_i32_0 : i32, i32, i32
  }
  func.func @transform_18(%arg0: i32, %arg1: i32) -> (i32, i32, i32) {
    %c0_i32 = arith.constant 0 : i32
    %c0_i32_0 = arith.constant 0 : i32
    %c0_i32_1 = arith.constant 0 : i32
    return %arg1, %c0_i32, %c0_i32_0 : i32, i32, i32
  }
  func.func @transform_19(%arg0: i32, %arg1: i32) -> (i32, i32, i32) {
    %c0_i32 = arith.constant 0 : i32
    %c0_i32_0 = arith.constant 0 : i32
    %c0_i32_1 = arith.constant 0 : i32
    return %arg1, %c0_i32, %c0_i32_0 : i32, i32, i32
  }
  func.func @transform_20(%arg0: i32, %arg1: i32) -> i32 {
    %c0_i32 = arith.constant 0 : i32
    %c0_i32_0 = arith.constant 0 : i32
    return %c0_i32 : i32
  }
  func.func @transform_21(%arg0: i32, %arg1: i32) -> i32 {
    %c0_i32 = arith.constant 0 : i32
    %c0_i32_0 = arith.constant 0 : i32
    return %c0_i32 : i32
  }
  func.func @transform_22(%arg0: i32, %arg1: i32) -> (i32, i32) {
    %c0_i32 = arith.constant 0 : i32
    %c0_i32_0 = arith.constant 0 : i32
    return %arg0, %c0_i32 : i32, i32
  }
}

</mosaic_0001>

<llo_original>
// kernel: tpu_custom_call.1
$region0: #{tpu_custom_call.1}
  #allocation0 [shape = 'u32[]', space=smem, size = 0x4, offset = 0x4, fixed_abs, tag = 'smem constant byte address 0x4 - core index']
  #allocation1 [shape = 'u32[144,128]{1,0:T(1,128)}', space=vmem, size = 0x12000, scoped, tag = 'internal scratch']
  #allocation2 [shape = 'f32[32,128]{1,0:T(8,128)}', space=vmem, size = 0x4000, scoped, tag = 'scratch operand']
  %s0 = inlined_call_operand.vmem [shape: f32[64,8], index: 0, kind: input, shape index: {}]
  %s1 = inlined_call_operand.vmem [shape: bf16[8,128], index: 1, kind: input, shape index: {}]
  %s2 = inlined_call_operand.vmem [shape: f32[1,128], index: 2, kind: input, shape index: {}]
  %s3 = inlined_call_operand.hbm [shape: f32[1,128], index: 3, kind: input, shape index: {}]
  %s4 = inlined_call_operand.vmem [shape: bf16[128,128], index: 4, kind: input, shape index: {}]
  %s5 = inlined_call_operand.hbm [shape: f32[1,128], index: 5, kind: input, shape index: {}]
  %s6 = inlined_call_operand.vmem [shape: bf16[4,128,128], index: 6, kind: input, shape index: {}]
  %s7 = inlined_call_operand.vmem [shape: f32[4,1,128], index: 7, kind: input, shape index: {}]
  %s8 = inlined_call_operand.vmem [shape: f32[4,1,128], index: 8, kind: input, shape index: {}]
  %s9 = inlined_call_operand.vmem [shape: f32[4,1,128], index: 9, kind: input, shape index: {}]
  %s10 = inlined_call_operand.vmem [shape: f32[4,3,128], index: 10, kind: input, shape index: {}]
  %s11 = inlined_call_operand.vmem [shape: f32[4,1,128], index: 11, kind: input, shape index: {}]
  %s12 = inlined_call_operand.vmem [shape: f32[4,1,128], index: 12, kind: input, shape index: {}]
  %s13 = inlined_call_operand.vmem [shape: f32[4,1,128], index: 13, kind: input, shape index: {}]
  %s14 = inlined_call_operand.hbm [shape: bf16[4,128,128], index: 14, kind: input, shape index: {}]
  %s15 = inlined_call_operand.vmem [shape: f32[4,1,128], index: 15, kind: input, shape index: {}]
  %s16 = inlined_call_operand.vmem [shape: bf16[4,128,8], index: 16, kind: input, shape index: {}]
  %s17 = inlined_call_operand.hbm [shape: f32[4,1,8], index: 17, kind: input, shape index: {}]
  %s18 = inlined_call_operand.vmem [shape: bf16[4,8,128], index: 18, kind: input, shape index: {}]
  %s19 = inlined_call_operand.vmem [shape: f32[4,1,128], index: 19, kind: input, shape index: {}]
  %s20 = inlined_call_operand.vmem [shape: f32[8], index: 20, kind: input, shape index: {}]
  %s21 = inlined_call_operand.vmem [shape: s32[4], index: 21, kind: input, shape index: {}]
  %s22 = inlined_call_operand.hbm [shape: f32[64,128], index: 22, kind: output, shape index: {}]
  %s23 = sld [smem:[#allocation0]]
  $region153: #{tpu_custom_call.1} parent=0
    _
  %s25 = ssub.s32 1, %s23
  %s26 = scalar_select 0, %s25, %s23
  $region1: #{tpu_custom_call.1} parent=0
    #allocation3 [shape = 'u8[512]{0}', space=vmem, size = 0x400, scoped, tag = 'input window, operand 3, single buffered']
    #allocation4 [shape = 's32[2]{0}', space=sflag, size = 0x8, scoped, tag = 'scoped memory for tpu_custom_call.1']
    #allocation5 [shape = 's32[2]{0}', space=sflag, size = 0x8, scoped, tag = 'scoped memory for tpu_custom_call.1']
    #allocation6 [shape = 's32[2]{0}', space=sflag, size = 0x8, scoped, tag = 'scoped memory for tpu_custom_call.1']
    #allocation7 [shape = 'u8[512]{0}', space=vmem, size = 0x400, scoped, tag = 'input window, operand 5, single buffered']
    #allocation8 [shape = 's32[1]{0}', space=sflag, size = 0x4, scoped, tag = 'scoped memory for tpu_custom_call.1']
    #allocation9 [shape = 'u8[65536]{0}', space=vmem, size = 0x10000, scoped, tag = 'input window, operand 14']
    #allocation10 [shape = 'u8[1024]{0}', space=vmem, size = 0x400, scoped, tag = 'input window, operand 17']
    #allocation11 [shape = 'u8[512]{0}', space=smem, size = 0x200, scoped, tag = 'input window, operand 20, single buffered']
    #allocation12 [shape = 'u8[512]{0}', space=smem, size = 0x200, scoped, tag = 'input window, operand 21, single buffered']
    #allocation13 [shape = 's32[1]{0}', space=sflag, size = 0x4, scoped, tag = 'scoped memory for tpu_custom_call.1']
    #allocation14 [shape = 'u8[32768]{0}', space=vmem, size = 0x8000, scoped, tag = 'output window, operand 0']
    %27 = vsyncpa [#allocation4], 0
    %28 = vsyncpa [#allocation8], 0
    %29 = vsyncpa [#allocation6], 0
    %30 = vsyncpa [#allocation13], 0
    %31 = vsyncpa [#allocation5], 0
    %s32 = scalar_lea.sflag [#allocation5], 1
    %33 = vsyncpa %s32, 0
    loop: start=0, step=1, limit=10
    $region2: #{tpu_custom_call.1} parent=1 // loop_pre_header
      _
    $region3: #{tpu_custom_call.1} parent=1 // loop_header
      %s35 = sphi 0, %s39
      %p36 = scmp.ge.s32.totalorder %s35, 10
      %s42 = sphi 0, %s54
      %s43 = sphi 0, %s50
      %s44 = sphi 0, %s42
      %s45 = sphi 0, %s43
      %s46 = sphi 0, %s44
      %s47 = sphi 0, %s45
      %s57 = sphi 0, %s59
      %s60 = sphi 0, %s57
      %s61 = sphi 0, %s60
      %s77 = sphi 0, %s61
      %s81 = sphi 0, %s81
      %s83 = sphi 0, %s81
      %s84 = sphi 0, %s83
      %s98 = sphi 0, %s84
      %s102 = sphi 0, %s102
      %s104 = sphi 0, %s102
      %s105 = sphi 0, %s104
      %s119 = sphi 0, %s105
      %s123 = sphi 0, %s123
      %s125 = sphi 0, %s123
      %s126 = sphi 0, %s125
      %s140 = sphi 0, %s126
      %s144 = sphi 0, %s144
      %s146 = sphi 0, %s144
      %s147 = sphi 0, %s146
      %s161 = sphi 0, %s147
      %s165 = sphi 0, %s165
      %s167 = sphi 0, %s165
      %s168 = sphi 0, %s167
      %s182 = sphi 0, %s168
      %s188 = sphi 0, %s190
      %s191 = sphi 0, %s188
      %s192 = sphi 0, %s191
      %s208 = sphi 0, %s192
      %s214 = sphi 0, %s216
      %s217 = sphi 0, %s214
      %s218 = sphi 0, %s217
      %s234 = sphi 0, %s218
      %s240 = sphi 0, %s242
      %s243 = sphi 0, %s240
      %s244 = sphi 0, %s243
      %s260 = sphi 0, %s244
      %s266 = sphi 0, %s268
      %s269 = sphi 0, %s266
      %s270 = sphi 0, %s269
      %s286 = sphi 0, %s270
      %s292 = sphi 0, %s294
      %s295 = sphi 0, %s292
      %s296 = sphi 0, %s295
      %s312 = sphi 0, %s296
      %s318 = sphi 0, %s320
      %s321 = sphi 0, %s318
      %s322 = sphi 0, %s321
      %s338 = sphi 0, %s322
      %s344 = sphi 0, %s346
      %s347 = sphi 0, %s344
      %s348 = sphi 0, %s347
      %s364 = sphi 0, %s348
      %s370 = sphi 0, %s372
      %s373 = sphi 0, %s370
      %s374 = sphi 0, %s373
      %s390 = sphi 0, %s374
      %s396 = sphi 0, %s398
      %s399 = sphi 0, %s396
      %s400 = sphi 0, %s399
      %s416 = sphi 0, %s400
      %s422 = sphi 0, %s424
      %s425 = sphi 0, %s422
      %s426 = sphi 0, %s425
      %s442 = sphi 0, %s426
      %s448 = sphi 0, %s450
      %s451 = sphi 0, %s448
      %s452 = sphi 0, %s451
      %s468 = sphi 0, %s452
      %s474 = sphi 0, %s476
      %s477 = sphi 0, %s474
      %s478 = sphi 0, %s477
      %s494 = sphi 0, %s478
      %s500 = sphi 0, %s502
      %s503 = sphi 0, %s500
      %s504 = sphi 0, %s503
      %s520 = sphi 0, %s504
      %s526 = sphi 0, %s528
      %s529 = sphi 0, %s526
      %s530 = sphi 0, %s529
      %s546 = sphi 0, %s530
      %s550 = sphi 0, %s550
      %s552 = sphi 0, %s550
      %s553 = sphi 0, %s552
      %s567 = sphi 0, %s553
      %s571 = sphi 0, %s571
      %s573 = sphi 0, %s571
      %s574 = sphi 0, %s573
      %s588 = sphi 0, %s574
      %s594 = sphi 0, %s596
      %s597 = sphi 0, %s594
      %s598 = sphi 0, %s597
      %s614 = sphi 0, %s598
    $region4: #{tpu_custom_call.1} parent=1 // loop_header_branch
      %38 = sbr.rel (%p36) target = $region8
    $region5: #{tpu_custom_call.1} parent=1 // loop_body
      %s40 = ssub.s32 %s35, 1
      %s41 = ssub.s32 %s35, 2
      %s48 = sadd.s32 1, %s43
      %p49 = scmp.ge.s32.totalorder %s48, 4
      %s50 = scalar_select %p49, 0, %s48
      %s51 = sadd.s32 1, %s42
      %s52 = scalar_select %p49, %s51, %s42
      %p53 = scmp.ge.s32.totalorder %s52, 2
      %s54 = scalar_select %p53, 0, %s52
      %s55 = ssub.s32 %s42, %s54
      %p56 = scmp.eq.s32.totalorder %s55, 0
      %s58 = sadd.s32 %s57, 1
      %s59 = scalar_select %p56, %s57, %s58
      %p62 = pneg %p56
      %p63 = scmp.eq.s32.totalorder %s35, 7
      %p64 = por %p62, %p63
      %p65 = scmp.ne.s32.totalorder %s57, %s60
      %p66 = scmp.eq.s32.totalorder %s35, 0
      %p67 = por %p65, %p66
      %p68 = scmp.ne.s32.totalorder %s57, %s60
      %p69 = scmp.eq.s32.totalorder %s40, 7
      %p70 = por %p68, %p69
      %p71 = scmp.ne.s32.totalorder %s60, %s61
      %p72 = scmp.eq.s32.totalorder %s40, 0
      %p73 = por %p71, %p72
      %p74 = scmp.ne.s32.totalorder %s60, %s61
      %p75 = scmp.eq.s32.totalorder %s41, 7
      %p76 = por %p74, %p75
      %p78 = scmp.ne.s32.totalorder %s61, %s77
      %p79 = scmp.eq.s32.totalorder %s41, 0
      %p80 = por %p78, %p79
      %s82 = sadd.s32 %s81, 1
      %p85 = scmp.eq.s32.totalorder %s35, 7
      %p86 = scmp.ne.s32.totalorder %s81, %s83
      %p87 = scmp.eq.s32.totalorder %s35, 0
      %p88 = por %p86, %p87
      %p89 = scmp.ne.s32.totalorder %s81, %s83
      %p90 = scmp.eq.s32.totalorder %s40, 7
      %p91 = por %p89, %p90
      %p92 = scmp.ne.s32.totalorder %s83, %s84
      %p93 = scmp.eq.s32.totalorder %s40, 0
      %p94 = por %p92, %p93
      %p95 = scmp.ne.s32.totalorder %s83, %s84
      %p96 = scmp.eq.s32.totalorder %s41, 7
      %p97 = por %p95, %p96
      %p99 = scmp.ne.s32.totalorder %s84, %s98
      %p100 = scmp.eq.s32.totalorder %s41, 0
      %p101 = por %p99, %p100
      %s103 = sadd.s32 %s102, 1
      %p106 = scmp.eq.s32.totalorder %s35, 7
      %p107 = scmp.ne.s32.totalorder %s102, %s104
      %p108 = scmp.eq.s32.totalorder %s35, 0
      %p109 = por %p107, %p108
      %p110 = scmp.ne.s32.totalorder %s102, %s104
      %p111 = scmp.eq.s32.totalorder %s40, 7
      %p112 = por %p110, %p111
      %p113 = scmp.ne.s32.totalorder %s104, %s105
      %p114 = scmp.eq.s32.totalorder %s40, 0
      %p115 = por %p113, %p114
      %p116 = scmp.ne.s32.totalorder %s104, %s105
      %p117 = scmp.eq.s32.totalorder %s41, 7
      %p118 = por %p116, %p117
      %p120 = scmp.ne.s32.totalorder %s105, %s119
      %p121 = scmp.eq.s32.totalorder %s41, 0
      %p122 = por %p120, %p121
      %s124 = sadd.s32 %s123, 1
      %p127 = scmp.eq.s32.totalorder %s35, 7
      %p128 = scmp.ne.s32.totalorder %s123, %s125
      %p129 = scmp.eq.s32.totalorder %s35, 0
      %p130 = por %p128, %p129
      %p131 = scmp.ne.s32.totalorder %s123, %s125
      %p132 = scmp.eq.s32.totalorder %s40, 7
      %p133 = por %p131, %p132
      %p134 = scmp.ne.s32.totalorder %s125, %s126
      %p135 = scmp.eq.s32.totalorder %s40, 0
      %p136 = por %p134, %p135
      %p137 = scmp.ne.s32.totalorder %s125, %s126
      %p138 = scmp.eq.s32.totalorder %s41, 7
      %p139 = por %p137, %p138
      %p141 = scmp.ne.s32.totalorder %s126, %s140
      %p142 = scmp.eq.s32.totalorder %s41, 0
      %p143 = por %p141, %p142
      %s145 = sadd.s32 %s144, 1
      %p148 = scmp.eq.s32.totalorder %s35, 7
      %p149 = scmp.ne.s32.totalorder %s144, %s146
      %p150 = scmp.eq.s32.totalorder %s35, 0
      %p151 = por %p149, %p150
      %p152 = scmp.ne.s32.totalorder %s144, %s146
      %p153 = scmp.eq.s32.totalorder %s40, 7
      %p154 = por %p152, %p153
      %p155 = scmp.ne.s32.totalorder %s146, %s147
      %p156 = scmp.eq.s32.totalorder %s40, 0
      %p157 = por %p155, %p156
      %p158 = scmp.ne.s32.totalorder %s146, %s147
      %p159 = scmp.eq.s32.totalorder %s41, 7
      %p160 = por %p158, %p159
      %p162 = scmp.ne.s32.totalorder %s147, %s161
      %p163 = scmp.eq.s32.totalorder %s41, 0
      %p164 = por %p162, %p163
      %s166 = sadd.s32 %s165, 1
      %p169 = scmp.eq.s32.totalorder %s35, 7
      %p170 = scmp.ne.s32.totalorder %s165, %s167
      %p171 = scmp.eq.s32.totalorder %s35, 0
      %p172 = por %p170, %p171
      %p173 = scmp.ne.s32.totalorder %s165, %s167
      %p174 = scmp.eq.s32.totalorder %s40, 7
      %p175 = por %p173, %p174
      %p176 = scmp.ne.s32.totalorder %s167, %s168
      %p177 = scmp.eq.s32.totalorder %s40, 0
      %p178 = por %p176, %p177
      %p179 = scmp.ne.s32.totalorder %s167, %s168
      %p180 = scmp.eq.s32.totalorder %s41, 7
      %p181 = por %p179, %p180
      %p183 = scmp.ne.s32.totalorder %s168, %s182
      %p184 = scmp.eq.s32.totalorder %s41, 0
      %p185 = por %p183, %p184
      %s186 = ssub.s32 %s43, %s50
      %p187 = scmp.eq.s32.totalorder %s186, 0
      %s189 = sadd.s32 %s188, 1
      %s190 = scalar_select %p187, %s188, %s189
      %p193 = pneg %p187
      %p194 = scmp.eq.s32.totalorder %s35, 7
      %p195 = por %p193, %p194
      %p196 = scmp.ne.s32.totalorder %s188, %s191
      %p197 = scmp.eq.s32.totalorder %s35, 0
      %p198 = por %p196, %p197
      %p199 = scmp.ne.s32.totalorder %s188, %s191
      %p200 = scmp.eq.s32.totalorder %s40, 7
      %p201 = por %p199, %p200
      %p202 = scmp.ne.s32.totalorder %s191, %s192
      %p203 = scmp.eq.s32.totalorder %s40, 0
      %p204 = por %p202, %p203
      %p205 = scmp.ne.s32.totalorder %s191, %s192
      %p206 = scmp.eq.s32.totalorder %s41, 7
      %p207 = por %p205, %p206
      %p209 = scmp.ne.s32.totalorder %s192, %s208
      %p210 = scmp.eq.s32.totalorder %s41, 0
      %p211 = por %p209, %p210
      %s212 = ssub.s32 %s43, %s50
      %p213 = scmp.eq.s32.totalorder %s212, 0
      %s215 = sadd.s32 %s214, 1
      %s216 = scalar_select %p213, %s214, %s215
      %p219 = pneg %p213
      %p220 = scmp.eq.s32.totalorder %s35, 7
      %p221 = por %p219, %p220
      %p222 = scmp.ne.s32.totalorder %s214, %s217
      %p223 = scmp.eq.s32.totalorder %s35, 0
      %p224 = por %p222, %p223
      %p225 = scmp.ne.s32.totalorder %s214, %s217
      %p226 = scmp.eq.s32.totalorder %s40, 7
      %p227 = por %p225, %p226
      %p228 = scmp.ne.s32.totalorder %s217, %s218
      %p229 = scmp.eq.s32.totalorder %s40, 0
      %p230 = por %p228, %p229
      %p231 = scmp.ne.s32.totalorder %s217, %s218
      %p232 = scmp.eq.s32.totalorder %s41, 7
      %p233 = por %p231, %p232
      %p235 = scmp.ne.s32.totalorder %s218, %s234
      %p236 = scmp.eq.s32.totalorder %s41, 0
      %p237 = por %p235, %p236
      %s238 = ssub.s32 %s43, %s50
      %p239 = scmp.eq.s32.totalorder %s238, 0
      %s241 = sadd.s32 %s240, 1
      %s242 = scalar_select %p239, %s240, %s241
      %p245 = pneg %p239
      %p246 = scmp.eq.s32.totalorder %s35, 7
      %p247 = por %p245, %p246
      %p248 = scmp.ne.s32.totalorder %s240, %s243
      %p249 = scmp.eq.s32.totalorder %s35, 0
      %p250 = por %p248, %p249
      %p251 = scmp.ne.s32.totalorder %s240, %s243
      %p252 = scmp.eq.s32.totalorder %s40, 7
      %p253 = por %p251, %p252
      %p254 = scmp.ne.s32.totalorder %s243, %s244
      %p255 = scmp.eq.s32.totalorder %s40, 0
      %p256 = por %p254, %p255
      %p257 = scmp.ne.s32.totalorder %s243, %s244
      %p258 = scmp.eq.s32.totalorder %s41, 7
      %p259 = por %p257, %p258
      %p261 = scmp.ne.s32.totalorder %s244, %s260
      %p262 = scmp.eq.s32.totalorder %s41, 0
      %p263 = por %p261, %p262
      %s264 = ssub.s32 %s43, %s50
      %p265 = scmp.eq.s32.totalorder %s264, 0
      %s267 = sadd.s32 %s266, 1
      %s268 = scalar_select %p265, %s266, %s267
      %p271 = pneg %p265
      %p272 = scmp.eq.s32.totalorder %s35, 7
      %p273 = por %p271, %p272
      %p274 = scmp.ne.s32.totalorder %s266, %s269
      %p275 = scmp.eq.s32.totalorder %s35, 0
      %p276 = por %p274, %p275
      %p277 = scmp.ne.s32.totalorder %s266, %s269
      %p278 = scmp.eq.s32.totalorder %s40, 7
      %p279 = por %p277, %p278
      %p280 = scmp.ne.s32.totalorder %s269, %s270
      %p281 = scmp.eq.s32.totalorder %s40, 0
      %p282 = por %p280, %p281
      %p283 = scmp.ne.s32.totalorder %s269, %s270
      %p284 = scmp.eq.s32.totalorder %s41, 7
      %p285 = por %p283, %p284
      %p287 = scmp.ne.s32.totalorder %s270, %s286
      %p288 = scmp.eq.s32.totalorder %s41, 0
      %p289 = por %p287, %p288
      %s290 = ssub.s32 %s43, %s50
      %p291 = scmp.eq.s32.totalorder %s290, 0
      %s293 = sadd.s32 %s292, 1
      %s294 = scalar_select %p291, %s292, %s293
      %p297 = pneg %p291
      %p298 = scmp.eq.s32.totalorder %s35, 7
      %p299 = por %p297, %p298
      %p300 = scmp.ne.s32.totalorder %s292, %s295
      %p301 = scmp.eq.s32.totalorder %s35, 0
      %p302 = por %p300, %p301
      %p303 = scmp.ne.s32.totalorder %s292, %s295
      %p304 = scmp.eq.s32.totalorder %s40, 7
      %p305 = por %p303, %p304
      %p306 = scmp.ne.s32.totalorder %s295, %s296
      %p307 = scmp.eq.s32.totalorder %s40, 0
      %p308 = por %p306, %p307
      %p309 = scmp.ne.s32.totalorder %s295, %s296
      %p310 = scmp.eq.s32.totalorder %s41, 7
      %p311 = por %p309, %p310
      %p313 = scmp.ne.s32.totalorder %s296, %s312
      %p314 = scmp.eq.s32.totalorder %s41, 0
      %p315 = por %p313, %p314
      %s316 = ssub.s32 %s43, %s50
      %p317 = scmp.eq.s32.totalorder %s316, 0
      %s319 = sadd.s32 %s318, 1
      %s320 = scalar_select %p317, %s318, %s319
      %p323 = pneg %p317
      %p324 = scmp.eq.s32.totalorder %s35, 7
      %p325 = por %p323, %p324
      %p326 = scmp.ne.s32.totalorder %s318, %s321
      %p327 = scmp.eq.s32.totalorder %s35, 0
      %p328 = por %p326, %p327
      %p329 = scmp.ne.s32.totalorder %s318, %s321
      %p330 = scmp.eq.s32.totalorder %s40, 7
      %p331 = por %p329, %p330
      %p332 = scmp.ne.s32.totalorder %s321, %s322
      %p333 = scmp.eq.s32.totalorder %s40, 0
      %p334 = por %p332, %p333
      %p335 = scmp.ne.s32.totalorder %s321, %s322
      %p336 = scmp.eq.s32.totalorder %s41, 7
      %p337 = por %p335, %p336
      %p339 = scmp.ne.s32.totalorder %s322, %s338
      %p340 = scmp.eq.s32.totalorder %s41, 0
      %p341 = por %p339, %p340
      %s342 = ssub.s32 %s43, %s50
      %p343 = scmp.eq.s32.totalorder %s342, 0
      %s345 = sadd.s32 %s344, 1
      %s346 = scalar_select %p343, %s344, %s345
      %p349 = pneg %p343
      %p350 = scmp.eq.s32.totalorder %s35, 7
      %p351 = por %p349, %p350
      %p352 = scmp.ne.s32.totalorder %s344, %s347
      %p353 = scmp.eq.s32.totalorder %s35, 0
      %p354 = por %p352, %p353
      %p355 = scmp.ne.s32.totalorder %s344, %s347
      %p356 = scmp.eq.s32.totalorder %s40, 7
      %p357 = por %p355, %p356
      %p358 = scmp.ne.s32.totalorder %s347, %s348
      %p359 = scmp.eq.s32.totalorder %s40, 0
      %p360 = por %p358, %p359
      %p361 = scmp.ne.s32.totalorder %s347, %s348
      %p362 = scmp.eq.s32.totalorder %s41, 7
      %p363 = por %p361, %p362
      %p365 = scmp.ne.s32.totalorder %s348, %s364
      %p366 = scmp.eq.s32.totalorder %s41, 0
      %p367 = por %p365, %p366
      %s368 = ssub.s32 %s43, %s50
      %p369 = scmp.eq.s32.totalorder %s368, 0
      %s371 = sadd.s32 %s370, 1
      %s372 = scalar_select %p369, %s370, %s371
      %p375 = pneg %p369
      %p376 = scmp.eq.s32.totalorder %s35, 7
      %p377 = por %p375, %p376
      %p378 = scmp.ne.s32.totalorder %s370, %s373
      %p379 = scmp.eq.s32.totalorder %s35, 0
      %p380 = por %p378, %p379
      %p381 = scmp.ne.s32.totalorder %s370, %s373
      %p382 = scmp.eq.s32.totalorder %s40, 7
      %p383 = por %p381, %p382
      %p384 = scmp.ne.s32.totalorder %s373, %s374
      %p385 = scmp.eq.s32.totalorder %s40, 0
      %p386 = por %p384, %p385
      %p387 = scmp.ne.s32.totalorder %s373, %s374
      %p388 = scmp.eq.s32.totalorder %s41, 7
      %p389 = por %p387, %p388
      %p391 = scmp.ne.s32.totalorder %s374, %s390
      %p392 = scmp.eq.s32.totalorder %s41, 0
      %p393 = por %p391, %p392
      %s394 = ssub.s32 %s43, %s50
      %p395 = scmp.eq.s32.totalorder %s394, 0
      %s397 = sadd.s32 %s396, 1
      %s398 = scalar_select %p395, %s396, %s397
      %p401 = pneg %p395
      %p402 = scmp.eq.s32.totalorder %s35, 7
      %p403 = por %p401, %p402
      %p404 = scmp.ne.s32.totalorder %s396, %s399
      %p405 = scmp.eq.s32.totalorder %s35, 0
      %p406 = por %p404, %p405
      %p407 = scmp.ne.s32.totalorder %s396, %s399
      %p408 = scmp.eq.s32.totalorder %s40, 7
      %p409 = por %p407, %p408
      %p410 = scmp.ne.s32.totalorder %s399, %s400
      %p411 = scmp.eq.s32.totalorder %s40, 0
      %p412 = por %p410, %p411
      %p413 = scmp.ne.s32.totalorder %s399, %s400
      %p414 = scmp.eq.s32.totalorder %s41, 7
      %p415 = por %p413, %p414
      %p417 = scmp.ne.s32.totalorder %s400, %s416
      %p418 = scmp.eq.s32.totalorder %s41, 0
      %p419 = por %p417, %p418
      %s420 = ssub.s32 %s43, %s50
      %p421 = scmp.eq.s32.totalorder %s420, 0
      %s423 = sadd.s32 %s422, 1
      %s424 = scalar_select %p421, %s422, %s423
      %p427 = pneg %p421
      %p428 = scmp.eq.s32.totalorder %s35, 7
      %p429 = por %p427, %p428
      %p430 = scmp.ne.s32.totalorder %s422, %s425
      %p431 = scmp.eq.s32.totalorder %s35, 0
      %p432 = por %p430, %p431
      %p433 = scmp.ne.s32.totalorder %s422, %s425
      %p434 = scmp.eq.s32.totalorder %s40, 7
      %p435 = por %p433, %p434
      %p436 = scmp.ne.s32.totalorder %s425, %s426
      %p437 = scmp.eq.s32.totalorder %s40, 0
      %p438 = por %p436, %p437
      %p439 = scmp.ne.s32.totalorder %s425, %s426
      %p440 = scmp.eq.s32.totalorder %s41, 7
      %p441 = por %p439, %p440
      %p443 = scmp.ne.s32.totalorder %s426, %s442
      %p444 = scmp.eq.s32.totalorder %s41, 0
      %p445 = por %p443, %p444
      %s446 = ssub.s32 %s43, %s50
      %p447 = scmp.eq.s32.totalorder %s446, 0
      %s449 = sadd.s32 %s448, 1
      %s450 = scalar_select %p447, %s448, %s449
      %p453 = pneg %p447
      %p454 = scmp.eq.s32.totalorder %s35, 7
      %p455 = por %p453, %p454
      %p456 = scmp.ne.s32.totalorder %s448, %s451
      %p457 = scmp.eq.s32.totalorder %s35, 0
      %p458 = por %p456, %p457
      %p459 = scmp.ne.s32.totalorder %s448, %s451
      %p460 = scmp.eq.s32.totalorder %s40, 7
      %p461 = por %p459, %p460
      %p462 = scmp.ne.s32.totalorder %s451, %s452
      %p463 = scmp.eq.s32.totalorder %s40, 0
      %p464 = por %p462, %p463
      %p465 = scmp.ne.s32.totalorder %s451, %s452
      %p466 = scmp.eq.s32.totalorder %s41, 7
      %p467 = por %p465, %p466
      %p469 = scmp.ne.s32.totalorder %s452, %s468
      %p470 = scmp.eq.s32.totalorder %s41, 0
      %p471 = por %p469, %p470
      %s472 = ssub.s32 %s43, %s50
      %p473 = scmp.eq.s32.totalorder %s472, 0
      %s475 = sadd.s32 %s474, 1
      %s476 = scalar_select %p473, %s474, %s475
      %p479 = pneg %p473
      %p480 = scmp.eq.s32.totalorder %s35, 7
      %p481 = por %p479, %p480
      %p482 = scmp.ne.s32.totalorder %s474, %s477
      %p483 = scmp.eq.s32.totalorder %s35, 0
      %p484 = por %p482, %p483
      %p485 = scmp.ne.s32.totalorder %s474, %s477
      %p486 = scmp.eq.s32.totalorder %s40, 7
      %p487 = por %p485, %p486
      %p488 = scmp.ne.s32.totalorder %s477, %s478
      %p489 = scmp.eq.s32.totalorder %s40, 0
      %p490 = por %p488, %p489
      %p491 = scmp.ne.s32.totalorder %s477, %s478
      %p492 = scmp.eq.s32.totalorder %s41, 7
      %p493 = por %p491, %p492
      %p495 = scmp.ne.s32.totalorder %s478, %s494
      %p496 = scmp.eq.s32.totalorder %s41, 0
      %p497 = por %p495, %p496
      %s498 = ssub.s32 %s43, %s50
      %p499 = scmp.eq.s32.totalorder %s498, 0
      %s501 = sadd.s32 %s500, 1
      %s502 = scalar_select %p499, %s500, %s501
      %p505 = pneg %p499
      %p506 = scmp.eq.s32.totalorder %s35, 7
      %p507 = por %p505, %p506
      %p508 = scmp.ne.s32.totalorder %s500, %s503
      %p509 = scmp.eq.s32.totalorder %s35, 0
      %p510 = por %p508, %p509
      %p511 = scmp.ne.s32.totalorder %s500, %s503
      %p512 = scmp.eq.s32.totalorder %s40, 7
      %p513 = por %p511, %p512
      %p514 = scmp.ne.s32.totalorder %s503, %s504
      %p515 = scmp.eq.s32.totalorder %s40, 0
      %p516 = por %p514, %p515
      %p517 = scmp.ne.s32.totalorder %s503, %s504
      %p518 = scmp.eq.s32.totalorder %s41, 7
      %p519 = por %p517, %p518
      %p521 = scmp.ne.s32.totalorder %s504, %s520
      %p522 = scmp.eq.s32.totalorder %s41, 0
      %p523 = por %p521, %p522
      %s524 = ssub.s32 %s43, %s50
      %p525 = scmp.eq.s32.totalorder %s524, 0
      %s527 = sadd.s32 %s526, 1
      %s528 = scalar_select %p525, %s526, %s527
      %p531 = pneg %p525
      %p532 = scmp.eq.s32.totalorder %s35, 7
      %p533 = por %p531, %p532
      %p534 = scmp.ne.s32.totalorder %s526, %s529
      %p535 = scmp.eq.s32.totalorder %s35, 0
      %p536 = por %p534, %p535
      %p537 = scmp.ne.s32.totalorder %s526, %s529
      %p538 = scmp.eq.s32.totalorder %s40, 7
      %p539 = por %p537, %p538
      %p540 = scmp.ne.s32.totalorder %s529, %s530
      %p541 = scmp.eq.s32.totalorder %s40, 0
      %p542 = por %p540, %p541
      %p543 = scmp.ne.s32.totalorder %s529, %s530
      %p544 = scmp.eq.s32.totalorder %s41, 7
      %p545 = por %p543, %p544
      %p547 = scmp.ne.s32.totalorder %s530, %s546
      %p548 = scmp.eq.s32.totalorder %s41, 0
      %p549 = por %p547, %p548
      %s551 = sadd.s32 %s550, 1
      %p554 = scmp.eq.s32.totalorder %s35, 7
      %p555 = scmp.ne.s32.totalorder %s550, %s552
      %p556 = scmp.eq.s32.totalorder %s35, 0
      %p557 = por %p555, %p556
      %p558 = scmp.ne.s32.totalorder %s550, %s552
      %p559 = scmp.eq.s32.totalorder %s40, 7
      %p560 = por %p558, %p559
      %p561 = scmp.ne.s32.totalorder %s552, %s553
      %p562 = scmp.eq.s32.totalorder %s40, 0
      %p563 = por %p561, %p562
      %p564 = scmp.ne.s32.totalorder %s552, %s553
      %p565 = scmp.eq.s32.totalorder %s41, 7
      %p566 = por %p564, %p565
      %p568 = scmp.ne.s32.totalorder %s553, %s567
      %p569 = scmp.eq.s32.totalorder %s41, 0
      %p570 = por %p568, %p569
      %s572 = sadd.s32 %s571, 1
      %p575 = scmp.eq.s32.totalorder %s35, 7
      %p576 = scmp.ne.s32.totalorder %s571, %s573
      %p577 = scmp.eq.s32.totalorder %s35, 0
      %p578 = por %p576, %p577
      %p579 = scmp.ne.s32.totalorder %s571, %s573
      %p580 = scmp.eq.s32.totalorder %s40, 7
      %p581 = por %p579, %p580
      %p582 = scmp.ne.s32.totalorder %s573, %s574
      %p583 = scmp.eq.s32.totalorder %s40, 0
      %p584 = por %p582, %p583
      %p585 = scmp.ne.s32.totalorder %s573, %s574
      %p586 = scmp.eq.s32.totalorder %s41, 7
      %p587 = por %p585, %p586
      %p589 = scmp.ne.s32.totalorder %s574, %s588
      %p590 = scmp.eq.s32.totalorder %s41, 0
      %p591 = por %p589, %p590
      %s592 = ssub.s32 %s42, %s54
      %p593 = scmp.eq.s32.totalorder %s592, 0
      %s595 = sadd.s32 %s594, 1
      %s596 = scalar_select %p593, %s594, %s595
      %p599 = pneg %p593
      %p600 = scmp.eq.s32.totalorder %s35, 7
      %p601 = por %p599, %p600
      %p602 = scmp.ne.s32.totalorder %s594, %s597
      %p603 = scmp.eq.s32.totalorder %s35, 0
      %p604 = por %p602, %p603
      %p605 = scmp.ne.s32.totalorder %s594, %s597
      %p606 = scmp.eq.s32.totalorder %s40, 7
      %p607 = por %p605, %p606
      %p608 = scmp.ne.s32.totalorder %s597, %s598
      %p609 = scmp.eq.s32.totalorder %s40, 0
      %p610 = por %p608, %p609
      %p611 = scmp.ne.s32.totalorder %s597, %s598
      %p612 = scmp.eq.s32.totalorder %s41, 7
      %p613 = por %p611, %p612
      %p615 = scmp.ne.s32.totalorder %s598, %s614
      %p616 = scmp.eq.s32.totalorder %s41, 0
      %p617 = por %p615, %p616
      %p618 = scmp.le.s32.totalorder 1, %s35
      %p619 = scmp.lt.s32.totalorder %s35, 9
      %p620 = pnand %p618, %p619
      %p621 = pneg %p620
      // Predicated region
      $region9: #{tpu_custom_call.1} parent=5 // pred_check
        _
      $region10: #{tpu_custom_call.1} parent=5 // pred_check_branch
        %623 = sbr.rel (%p620) target = $region12
      $region11: #{tpu_custom_call.1} parent=5 // pred_region
        %s624 = ssub.s32 %s35, 1
        // Predicated region
        $region13: #{tpu_custom_call.1} parent=11 // pred_check
          %p625 = pneg %p94
        $region14: #{tpu_custom_call.1} parent=11 // pred_check_branch
          %627 = sbr.rel (%p625) target = $region16
        $region15: #{tpu_custom_call.1} parent=11 // pred_region
          _
        $region16: #{tpu_custom_call.1} parent=11 // pred_fallthru
          _
        // Predicated region
        $region17: #{tpu_custom_call.1} parent=11 // pred_check
          %p628 = pneg %p115
        $region18: #{tpu_custom_call.1} parent=11 // pred_check_branch
          %630 = sbr.rel (%p628) target = $region20
        $region19: #{tpu_custom_call.1} parent=11 // pred_region
          _
        $region20: #{tpu_custom_call.1} parent=11 // pred_fallthru
          _
        // Predicated region
        $region21: #{tpu_custom_call.1} parent=11 // pred_check
          %p631 = pneg %p136
        $region22: #{tpu_custom_call.1} parent=11 // pred_check_branch
          %633 = sbr.rel (%p631) target = $region24
        $region23: #{tpu_custom_call.1} parent=11 // pred_region
          %s635 = ssub.s32 16, 16
          %636 = vsyncadd [#allocation4], %s635
          %s638 = sshll.u32 [#allocation3], 4
          %s639 = int_to_ptr.vmem [resolvable:$true] %s638
          %641 = dma.hbm_to_vmem [thread:$0]  %s3, 16, %s639, [#allocation4]
        $region24: #{tpu_custom_call.1} parent=11 // pred_fallthru
          _
        // Predicated region
        $region25: #{tpu_custom_call.1} parent=11 // pred_check
          %p642 = pneg %p157
        $region26: #{tpu_custom_call.1} parent=11 // pred_check_branch
          %644 = sbr.rel (%p642) target = $region28
        $region27: #{tpu_custom_call.1} parent=11 // pred_region
          _
        $region28: #{tpu_custom_call.1} parent=11 // pred_fallthru
          _
        // Predicated region
        $region29: #{tpu_custom_call.1} parent=11 // pred_check
          %p645 = pneg %p178
        $region30: #{tpu_custom_call.1} parent=11 // pred_check_branch
          %647 = sbr.rel (%p645) target = $region32
        $region31: #{tpu_custom_call.1} parent=11 // pred_region
          %s649 = ssub.s32 16, 16
          %650 = vsyncadd [#allocation8], %s649
          %s652 = sshll.u32 [#allocation7], 4
          %s653 = int_to_ptr.vmem [resolvable:$true] %s652
          %655 = dma.hbm_to_vmem [thread:$0]  %s5, 16, %s653, [#allocation8]
        $region32: #{tpu_custom_call.1} parent=11 // pred_fallthru
          _
        // Predicated region
        $region33: #{tpu_custom_call.1} parent=11 // pred_check
          %p656 = pneg %p563
        $region34: #{tpu_custom_call.1} parent=11 // pred_check_branch
          %658 = sbr.rel (%p656) target = $region36
        $region35: #{tpu_custom_call.1} parent=11 // pred_region
          %s660 = ssub.s32 16, 16
          %661 = vsyncadd [#allocation6], %s660
          %s663 = sshll.u32 %s20, 4
          %s664 = int_to_ptr.vmem [resolvable:$true] %s663
          %666 = dma.vmem_to_smem %s664, 16, [#allocation11], [#allocation6]
        $region36: #{tpu_custom_call.1} parent=11 // pred_fallthru
          _
        // Predicated region
        $region37: #{tpu_custom_call.1} parent=11 // pred_check
          %p667 = pneg %p584
        $region38: #{tpu_custom_call.1} parent=11 // pred_check_branch
          %669 = sbr.rel (%p667) target = $region40
        $region39: #{tpu_custom_call.1} parent=11 // pred_region
          %s671 = ssub.s32 16, 16
          %672 = vsyncadd [#allocation13], %s671
          %s674 = sshll.u32 %s21, 4
          %s675 = int_to_ptr.vmem [resolvable:$true] %s674
          %677 = dma.vmem_to_smem %s675, 16, [#allocation12], [#allocation13]
        $region40: #{tpu_custom_call.1} parent=11 // pred_fallthru
          _
      $region12: #{tpu_custom_call.1} parent=5 // pred_fallthru
        _
      %p678 = scmp.lt.s32.totalorder %s35, 8
      // Predicated region
      $region41: #{tpu_custom_call.1} parent=5 // pred_check
        %p679 = pneg %p678
      $region42: #{tpu_custom_call.1} parent=5 // pred_check_branch
        %681 = sbr.rel (%p679) target = $region44
      $region43: #{tpu_custom_call.1} parent=5 // pred_region
        // Predicated region
        $region45: #{tpu_custom_call.1} parent=43 // pred_check
          %p682 = pneg %p67
        $region46: #{tpu_custom_call.1} parent=43 // pred_check_branch
          %684 = sbr.rel (%p682) target = $region48
        $region47: #{tpu_custom_call.1} parent=43 // pred_region
          %s685 = smul.u32 4, %s42
          %p686 = scmp.lt.s32.totalorder %s685, 7
          %s687 = scalar_select %p686, %s685, 7
          %s688 = smul.addr %s687, 8
          %s689 = scalar_lea.vmem %s0, %s688
          %s690 = smul.u32 4, %s42
        $region48: #{tpu_custom_call.1} parent=43 // pred_fallthru
          _
        // Predicated region
        $region49: #{tpu_custom_call.1} parent=43 // pred_check
          %p691 = pneg %p198
        $region50: #{tpu_custom_call.1} parent=43 // pred_check_branch
          %693 = sbr.rel (%p691) target = $region52
        $region51: #{tpu_custom_call.1} parent=43 // pred_region
          %p694 = scmp.lt.s32.totalorder %s43, 3
          %s695 = scalar_select %p694, %s43, 3
          %s696 = smul.addr %s695, 16
          %s697 = smul.addr %s696, 4
          %s698 = scalar_lea.vmem %s6, %s697
        $region52: #{tpu_custom_call.1} parent=43 // pred_fallthru
          _
        // Predicated region
        $region53: #{tpu_custom_call.1} parent=43 // pred_check
          %p699 = pneg %p224
        $region54: #{tpu_custom_call.1} parent=43 // pred_check_branch
          %701 = sbr.rel (%p699) target = $region56
        $region55: #{tpu_custom_call.1} parent=43 // pred_region
          %p702 = scmp.lt.s32.totalorder %s43, 3
          %s703 = scalar_select %p702, %s43, 3
          %s704 = scalar_lea.vmem %s7, %s703
        $region56: #{tpu_custom_call.1} parent=43 // pred_fallthru
          _
        // Predicated region
        $region57: #{tpu_custom_call.1} parent=43 // pred_check
          %p705 = pneg %p250
        $region58: #{tpu_custom_call.1} parent=43 // pred_check_branch
          %707 = sbr.rel (%p705) target = $region60
        $region59: #{tpu_custom_call.1} parent=43 // pred_region
          %p708 = scmp.lt.s32.totalorder %s43, 3
          %s709 = scalar_select %p708, %s43, 3
          %s710 = scalar_lea.vmem %s8, %s709
        $region60: #{tpu_custom_call.1} parent=43 // pred_fallthru
          _
        // Predicated region
        $region61: #{tpu_custom_call.1} parent=43 // pred_check
          %p711 = pneg %p276
        $region62: #{tpu_custom_call.1} parent=43 // pred_check_branch
          %713 = sbr.rel (%p711) target = $region64
        $region63: #{tpu_custom_call.1} parent=43 // pred_region
          %p714 = scmp.lt.s32.totalorder %s43, 3
          %s715 = scalar_select %p714, %s43, 3
          %s716 = scalar_lea.vmem %s9, %s715
        $region64: #{tpu_custom_call.1} parent=43 // pred_fallthru
          _
        // Predicated region
        $region65: #{tpu_custom_call.1} parent=43 // pred_check
          %p717 = pneg %p302
        $region66: #{tpu_custom_call.1} parent=43 // pred_check_branch
          %719 = sbr.rel (%p717) target = $region68
        $region67: #{tpu_custom_call.1} parent=43 // pred_region
          %p720 = scmp.lt.s32.totalorder %s43, 3
          %s721 = scalar_select %p720, %s43, 3
          %s722 = smul.addr %s721, 4
          %s723 = scalar_lea.vmem %s10, %s722
        $region68: #{tpu_custom_call.1} parent=43 // pred_fallthru
          _
        // Predicated region
        $region69: #{tpu_custom_call.1} parent=43 // pred_check
          %p724 = pneg %p328
        $region70: #{tpu_custom_call.1} parent=43 // pred_check_branch
          %726 = sbr.rel (%p724) target = $region72
        $region71: #{tpu_custom_call.1} parent=43 // pred_region
          %p727 = scmp.lt.s32.totalorder %s43, 3
          %s728 = scalar_select %p727, %s43, 3
          %s729 = scalar_lea.vmem %s11, %s728
        $region72: #{tpu_custom_call.1} parent=43 // pred_fallthru
          _
        // Predicated region
        $region73: #{tpu_custom_call.1} parent=43 // pred_check
          %p730 = pneg %p354
        $region74: #{tpu_custom_call.1} parent=43 // pred_check_branch
          %732 = sbr.rel (%p730) target = $region76
        $region75: #{tpu_custom_call.1} parent=43 // pred_region
          %p733 = scmp.lt.s32.totalorder %s43, 3
          %s734 = scalar_select %p733, %s43, 3
          %s735 = scalar_lea.vmem %s12, %s734
        $region76: #{tpu_custom_call.1} parent=43 // pred_fallthru
          _
        // Predicated region
        $region77: #{tpu_custom_call.1} parent=43 // pred_check
          %p736 = pneg %p380
        $region78: #{tpu_custom_call.1} parent=43 // pred_check_branch
          %738 = sbr.rel (%p736) target = $region80
        $region79: #{tpu_custom_call.1} parent=43 // pred_region
          %p739 = scmp.lt.s32.totalorder %s43, 3
          %s740 = scalar_select %p739, %s43, 3
          %s741 = scalar_lea.vmem %s13, %s740
        $region80: #{tpu_custom_call.1} parent=43 // pred_fallthru
          _
        // Predicated region
        $region81: #{tpu_custom_call.1} parent=43 // pred_check
          %p742 = pneg %p406
        $region82: #{tpu_custom_call.1} parent=43 // pred_check_branch
          %744 = sbr.rel (%p742) target = $region84
        $region83: #{tpu_custom_call.1} parent=43 // pred_region
          %s745 = sand.u32 %s35, 1
          %s746 = scalar_lea.sflag [#allocation4], %s745
          %s747 = sand.u32 %s396, 1
          %s748 = smul.addr %s747, 64
          %s749 = scalar_lea.vmem [#allocation9], %s748
          %s751 = ssub.s32 1024, 1024
          %752 = vsyncadd %s746, %s751
          %s753 = smul.addr %s43, 16
          %s754 = smul.addr %s753, 64
          %s755 = scalar_lea.hbm %s14, %s754
          %s756 = sshll.u32 %s749, 4
          %s757 = int_to_ptr.vmem [resolvable:$true] %s756
          %762 = dma.hbm_to_vmem [thread:$0]  %s755, 1024, %s757, %s746, 64, 64, 4
        $region84: #{tpu_custom_call.1} parent=43 // pred_fallthru
          _
        // Predicated region
        $region85: #{tpu_custom_call.1} parent=43 // pred_check
          %p763 = pneg %p432
        $region86: #{tpu_custom_call.1} parent=43 // pred_check_branch
          %765 = sbr.rel (%p763) target = $region88
        $region87: #{tpu_custom_call.1} parent=43 // pred_region
          %p766 = scmp.lt.s32.totalorder %s43, 3
          %s767 = scalar_select %p766, %s43, 3
          %s768 = scalar_lea.vmem %s15, %s767
        $region88: #{tpu_custom_call.1} parent=43 // pred_fallthru
          _
        // Predicated region
        $region89: #{tpu_custom_call.1} parent=43 // pred_check
          %p769 = pneg %p458
        $region90: #{tpu_custom_call.1} parent=43 // pred_check_branch
          %771 = sbr.rel (%p769) target = $region92
        $region91: #{tpu_custom_call.1} parent=43 // pred_region
          %p772 = scmp.lt.s32.totalorder %s43, 3
          %s773 = scalar_select %p772, %s43, 3
          %s774 = smul.addr %s773, 16
          %s775 = smul.addr %s774, 4
          %s776 = scalar_lea.vmem %s16, %s775
        $region92: #{tpu_custom_call.1} parent=43 // pred_fallthru
          _
        // Predicated region
        $region93: #{tpu_custom_call.1} parent=43 // pred_check
          %p777 = pneg %p484
        $region94: #{tpu_custom_call.1} parent=43 // pred_check_branch
          %779 = sbr.rel (%p777) target = $region96
        $region95: #{tpu_custom_call.1} parent=43 // pred_region
          %s780 = sand.u32 %s35, 1
          %s781 = scalar_lea.sflag [#allocation4], %s780
          %s782 = sand.u32 %s474, 1
          %s783 = scalar_lea.vmem [#allocation10], %s782
          %s785 = ssub.s32 16, 16
          %786 = vsyncadd %s781, %s785
          %s787 = smul.addr %s43, 16
          %s788 = scalar_lea.hbm %s17, %s787
          %s790 = sshll.u32 %s783, 4
          %s791 = int_to_ptr.vmem [resolvable:$true] %s790
          %793 = dma.hbm_to_vmem [thread:$0]  %s788, 16, %s791, %s781
        $region96: #{tpu_custom_call.1} parent=43 // pred_fallthru
          _
        // Predicated region
        $region97: #{tpu_custom_call.1} parent=43 // pred_check
          %p794 = pneg %p510
        $region98: #{tpu_custom_call.1} parent=43 // pred_check_branch
          %796 = sbr.rel (%p794) target = $region100
        $region99: #{tpu_custom_call.1} parent=43 // pred_region
          %p797 = scmp.lt.s32.totalorder %s43, 3
          %s798 = scalar_select %p797, %s43, 3
          %s799 = smul.addr %s798, 4
          %s800 = scalar_lea.vmem %s18, %s799
        $region100: #{tpu_custom_call.1} parent=43 // pred_fallthru
          _
        // Predicated region
        $region101: #{tpu_custom_call.1} parent=43 // pred_check
          %p801 = pneg %p536
        $region102: #{tpu_custom_call.1} parent=43 // pred_check_branch
          %803 = sbr.rel (%p801) target = $region104
        $region103: #{tpu_custom_call.1} parent=43 // pred_region
          %p804 = scmp.lt.s32.totalorder %s43, 3
          %s805 = scalar_select %p804, %s43, 3
          %s806 = scalar_lea.vmem %s19, %s805
        $region104: #{tpu_custom_call.1} parent=43 // pred_fallthru
          _
      $region44: #{tpu_custom_call.1} parent=5 // pred_fallthru
        _
      %p807 = scmp.le.s32.totalorder 1, %s35
      %p808 = scmp.lt.s32.totalorder %s35, 9
      %p809 = pnand %p807, %p808
      %p810 = pneg %p809
      // Predicated region
      $region105: #{tpu_custom_call.1} parent=5 // pred_check
        _
      $region106: #{tpu_custom_call.1} parent=5 // pred_check_branch
        %812 = sbr.rel (%p809) target = $region108
      $region107: #{tpu_custom_call.1} parent=5 // pred_region
        %s813 = ssub.s32 %s35, 1
        // Predicated region
        $region109: #{tpu_custom_call.1} parent=107 // pred_check
          %p814 = pneg %p136
        $region110: #{tpu_custom_call.1} parent=107 // pred_check_branch
          %816 = sbr.rel (%p814) target = $region112
        $region111: #{tpu_custom_call.1} parent=107 // pred_region
          %817 = dma.done [#allocation4], 16
        $region112: #{tpu_custom_call.1} parent=107 // pred_fallthru
          _
        // Predicated region
        $region113: #{tpu_custom_call.1} parent=107 // pred_check
          %p818 = pneg %p178
        $region114: #{tpu_custom_call.1} parent=107 // pred_check_branch
          %820 = sbr.rel (%p818) target = $region116
        $region115: #{tpu_custom_call.1} parent=107 // pred_region
          %821 = dma.done [#allocation8], 16
        $region116: #{tpu_custom_call.1} parent=107 // pred_fallthru
          _
        %s822 = sand.u32 %s40, 1
        %s823 = scalar_lea.sflag [#allocation4], %s822
        %s824 = sand.u32 %s399, 1
        %s825 = smul.addr %s824, 64
        %s826 = scalar_lea.vmem [#allocation9], %s825
        // Predicated region
        $region117: #{tpu_custom_call.1} parent=107 // pred_check
          %p827 = pneg %p412
        $region118: #{tpu_custom_call.1} parent=107 // pred_check_branch
          %829 = sbr.rel (%p827) target = $region120
        $region119: #{tpu_custom_call.1} parent=107 // pred_region
          %830 = dma.done %s823, 1024
        $region120: #{tpu_custom_call.1} parent=107 // pred_fallthru
          _
        %s831 = sand.u32 %s40, 1
        %s832 = scalar_lea.sflag [#allocation4], %s831
        %s833 = sand.u32 %s477, 1
        %s834 = scalar_lea.vmem [#allocation10], %s833
        // Predicated region
        $region121: #{tpu_custom_call.1} parent=107 // pred_check
          %p835 = pneg %p490
        $region122: #{tpu_custom_call.1} parent=107 // pred_check_branch
          %837 = sbr.rel (%p835) target = $region124
        $region123: #{tpu_custom_call.1} parent=107 // pred_region
          %838 = dma.done %s832, 16
        $region124: #{tpu_custom_call.1} parent=107 // pred_fallthru
          _
        // Predicated region
        $region125: #{tpu_custom_call.1} parent=107 // pred_check
          %p839 = pneg %p563
        $region126: #{tpu_custom_call.1} parent=107 // pred_check_branch
          %841 = sbr.rel (%p839) target = $region128
        $region127: #{tpu_custom_call.1} parent=107 // pred_region
          %842 = dma.done [#allocation6], 16
        $region128: #{tpu_custom_call.1} parent=107 // pred_fallthru
          _
        // Predicated region
        $region129: #{tpu_custom_call.1} parent=107 // pred_check
          %p843 = pneg %p584
        $region130: #{tpu_custom_call.1} parent=107 // pred_check_branch
          %845 = sbr.rel (%p843) target = $region132
        $region131: #{tpu_custom_call.1} parent=107 // pred_region
          %846 = dma.done [#allocation13], 16
        $region132: #{tpu_custom_call.1} parent=107 // pred_fallthru
          _
        %847 = sfence
        %s848 = smul.u32 4, %s44
        %p849 = scmp.lt.s32.totalorder %s848, 7
        %s850 = scalar_select %p849, %s848, 7
        %s851 = smul.addr %s850, 8
        %s852 = scalar_lea.vmem %s0, %s851
        %p853 = pneg %p73
        %p854 = pneg %p70
        %p855 = pneg %p94
        %p856 = pneg %p91
        %p857 = pneg %p115
        %p858 = pneg %p112
        %p859 = pneg %p136
        %p860 = pneg %p133
        %p861 = pneg %p157
        %p862 = pneg %p154
        %p863 = pneg %p178
        %p864 = pneg %p175
        %p865 = scmp.lt.s32.totalorder %s45, 3
        %s866 = scalar_select %p865, %s45, 3
        %s867 = smul.addr %s866, 16
        %s868 = smul.addr %s867, 4
        %s869 = scalar_lea.vmem %s6, %s868
        %p870 = pneg %p204
        %p871 = pneg %p201
        %p872 = scmp.lt.s32.totalorder %s45, 3
        %s873 = scalar_select %p872, %s45, 3
        %s874 = scalar_lea.vmem %s7, %s873
        %p875 = pneg %p230
        %p876 = pneg %p227
        %p877 = scmp.lt.s32.totalorder %s45, 3
        %s878 = scalar_select %p877, %s45, 3
        %s879 = scalar_lea.vmem %s8, %s878
        %p880 = pneg %p256
        %p881 = pneg %p253
        %p882 = scmp.lt.s32.totalorder %s45, 3
        %s883 = scalar_select %p882, %s45, 3
        %s884 = scalar_lea.vmem %s9, %s883
        %p885 = pneg %p282
        %p886 = pneg %p279
        %p887 = scmp.lt.s32.totalorder %s45, 3
        %s888 = scalar_select %p887, %s45, 3
        %s889 = smul.addr %s888, 4
        %s890 = scalar_lea.vmem %s10, %s889
        %p891 = pneg %p308
        %p892 = pneg %p305
        %p893 = scmp.lt.s32.totalorder %s45, 3
        %s894 = scalar_select %p893, %s45, 3
        %s895 = scalar_lea.vmem %s11, %s894
        %p896 = pneg %p334
        %p897 = pneg %p331
        %p898 = scmp.lt.s32.totalorder %s45, 3
        %s899 = scalar_select %p898, %s45, 3
        %s900 = scalar_lea.vmem %s12, %s899
        %p901 = pneg %p360
        %p902 = pneg %p357
        %p903 = scmp.lt.s32.totalorder %s45, 3
        %s904 = scalar_select %p903, %s45, 3
        %s905 = scalar_lea.vmem %s13, %s904
        %p906 = pneg %p386
        %p907 = pneg %p383
        %s908 = sand.u32 %s40, 1
        %s909 = scalar_lea.sflag [#allocation4], %s908
        %s910 = sand.u32 %s399, 1
        %s911 = smul.addr %s910, 64
        %s912 = scalar_lea.vmem [#allocation9], %s911
        %p913 = pneg %p412
        %p914 = pneg %p409
        %p915 = scmp.lt.s32.totalorder %s45, 3
        %s916 = scalar_select %p915, %s45, 3
        %s917 = scalar_lea.vmem %s15, %s916
        %p918 = pneg %p438
        %p919 = pneg %p435
        %p920 = scmp.lt.s32.totalorder %s45, 3
        %s921 = scalar_select %p920, %s45, 3
        %s922 = smul.addr %s921, 16
        %s923 = smul.addr %s922, 4
        %s924 = scalar_lea.vmem %s16, %s923
        %p925 = pneg %p464
        %p926 = pneg %p461
        %s927 = sand.u32 %s40, 1
        %s928 = scalar_lea.sflag [#allocation4], %s927
        %s929 = sand.u32 %s477, 1
        %s930 = scalar_lea.vmem [#allocation10], %s929
        %p931 = pneg %p490
        %p932 = pneg %p487
        %p933 = scmp.lt.s32.totalorder %s45, 3
        %s934 = scalar_select %p933, %s45, 3
        %s935 = smul.addr %s934, 4
        %s936 = scalar_lea.vmem %s18, %s935
        %p937 = pneg %p516
        %p938 = pneg %p513
        %p939 = scmp.lt.s32.totalorder %s45, 3
        %s940 = scalar_select %p939, %s45, 3
        %s941 = scalar_lea.vmem %s19, %s940
        %p942 = pneg %p542
        %p943 = pneg %p539
        %p944 = pneg %p563
        %p945 = pneg %p560
        %p946 = pneg %p584
        %p947 = pneg %p581
        %p948 = pneg %p610
        %p949 = pneg %p607
        %s950 = sand.u32 %s597, 1
        %s951 = scalar_lea.sflag [#allocation5], %s950
        %s952 = sand.u32 %s597, 1
        %s953 = smul.addr %s952, 32
        %s954 = scalar_lea.vmem [#allocation14], %s953
        %s955 = smul.u32 4, %s44
        %p956 = scmp.lt.s32.totalorder %s955, 7
        %s957 = scalar_select %p956, %s955, 7
        %s958 = smul.addr %s957, 8
        %s959 = scalar_lea.vmem %s0, %s958
        %s960 = smul.u32 4, %s44
        %p961 = scmp.lt.s32.totalorder %s45, 3
        %s962 = scalar_select %p961, %s45, 3
        %s963 = smul.addr %s962, 16
        %s964 = smul.addr %s963, 4
        %s965 = scalar_lea.vmem %s6, %s964
        %p966 = scmp.lt.s32.totalorder %s45, 3
        %s967 = scalar_select %p966, %s45, 3
        %s968 = scalar_lea.vmem %s7, %s967
        %p969 = scmp.lt.s32.totalorder %s45, 3
        %s970 = scalar_select %p969, %s45, 3
        %s971 = scalar_lea.vmem %s8, %s970
        %p972 = scmp.lt.s32.totalorder %s45, 3
        %s973 = scalar_select %p972, %s45, 3
        %s974 = scalar_lea.vmem %s9, %s973
        %p975 = scmp.lt.s32.totalorder %s45, 3
        %s976 = scalar_select %p975, %s45, 3
        %s977 = smul.addr %s976, 4
        %s978 = scalar_lea.vmem %s10, %s977
        %p979 = scmp.lt.s32.totalorder %s45, 3
        %s980 = scalar_select %p979, %s45, 3
        %s981 = scalar_lea.vmem %s11, %s980
        %p982 = scmp.lt.s32.totalorder %s45, 3
        %s983 = scalar_select %p982, %s45, 3
        %s984 = scalar_lea.vmem %s12, %s983
        %p985 = scmp.lt.s32.totalorder %s45, 3
        %s986 = scalar_select %p985, %s45, 3
        %s987 = scalar_lea.vmem %s13, %s986
        %p988 = scmp.lt.s32.totalorder %s45, 3
        %s989 = scalar_select %p988, %s45, 3
        %s990 = scalar_lea.vmem %s15, %s989
        %p991 = scmp.lt.s32.totalorder %s45, 3
        %s992 = scalar_select %p991, %s45, 3
        %s993 = smul.addr %s992, 16
        %s994 = smul.addr %s993, 4
        %s995 = scalar_lea.vmem %s16, %s994
        %p996 = scmp.lt.s32.totalorder %s45, 3
        %s997 = scalar_select %p996, %s45, 3
        %s998 = smul.addr %s997, 4
        %s999 = scalar_lea.vmem %s18, %s998
        %p1000 = scmp.lt.s32.totalorder %s45, 3
        %s1001 = scalar_select %p1000, %s45, 3
        %s1002 = scalar_lea.vmem %s19, %s1001
        %s1003 = smul.u32 4, %s44
        %v1005 = vlaneseq
        %v1006 = vshrl.u32 %v1005, 7
        %v1007 = vadd.s32 %v1006, 8
        %v1008 = vadd.s32 %v1006, 16
        %v1009 = vadd.s32 %v1006, 24
        %vm1010 = vcmp.lt.s32.totalorder %v1006, 0
        %v1011 = vsub.s32 0, %v1006
        %v1012 = vsel %vm1010, %v1011, %v1006
        %v1013 = vshrl.u32 %v1012, 5
        %v1014 = vand.u32 %v1012, 31
        %v1015 = vsub.s32 0, %v1014
        %v1016 = vsel %vm1010, %v1015, %v1014
        %vm1017 = vcmp.lt.s32.totalorder %v1007, 0
        %v1018 = vsub.s32 0, %v1007
        %v1019 = vsel %vm1017, %v1018, %v1007
        %v1020 = vshrl.u32 %v1019, 5
        %v1021 = vand.u32 %v1019, 31
        %v1022 = vsub.s32 0, %v1021
        %v1023 = vsel %vm1017, %v1022, %v1021
        %vm1024 = vcmp.lt.s32.totalorder %v1008, 0
        %v1025 = vsub.s32 0, %v1008
        %v1026 = vsel %vm1024, %v1025, %v1008
        %v1027 = vshrl.u32 %v1026, 5
        %v1028 = vand.u32 %v1026, 31
        %v1029 = vsub.s32 0, %v1028
        %v1030 = vsel %vm1024, %v1029, %v1028
        %vm1031 = vcmp.lt.s32.totalorder %v1009, 0
        %v1032 = vsub.s32 0, %v1009
        %v1033 = vsel %vm1031, %v1032, %v1009
        %v1034 = vshrl.u32 %v1033, 5
        %v1035 = vand.u32 %v1033, 31
        %v1036 = vsub.s32 0, %v1035
        %v1037 = vsel %vm1031, %v1036, %v1035
        %vm1038 = vcmp.ne.s32.totalorder %v1016, 0
        %vm1039 = vcmp.ne.s32.totalorder %v1023, 0
        %vm1040 = vcmp.ne.s32.totalorder %v1030, 0
        %vm1041 = vcmp.ne.s32.totalorder %v1037, 0
        %vm1042 = vcmp.lt.s32.totalorder %v1016, 0
        %vm1043 = vcmp.lt.s32.totalorder %v1023, 0
        %vm1044 = vcmp.lt.s32.totalorder %v1030, 0
        %vm1045 = vcmp.lt.s32.totalorder %v1037, 0
        %vm1046 = vmand %vm1042, %vm1038
        %vm1047 = vmand %vm1043, %vm1039
        %vm1048 = vmand %vm1044, %vm1040
        %vm1049 = vmand %vm1045, %vm1041
        %v1050 = vadd.s32 %v1016, 32
        %v1051 = vadd.s32 %v1023, 32
        %v1052 = vadd.s32 %v1030, 32
        %v1053 = vadd.s32 %v1037, 32
        %v1054 = vsel %vm1046, %v1050, %v1016
        %v1055 = vsel %vm1047, %v1051, %v1023
        %v1056 = vsel %vm1048, %v1052, %v1030
        %v1057 = vsel %vm1049, %v1053, %v1037
        %p1058 = scmp.eq.s32.totalorder %s45, 0
        // Predicated region
        $region133: #{tpu_custom_call.1} parent=107 // pred_check
          %p1059 = pneg %p1058
        $region134: #{tpu_custom_call.1} parent=107 // pred_check_branch
          %1061 = sbr.rel (%p1059) target = $region136
        $region135: #{tpu_custom_call.1} parent=107 // pred_region
          %v1062 = vld [vmem:[%s959] sm:$0xff]
          %v1063 = vld [vmem:[%s959 + $0x8] sm:$0xff]
          %v1064 = vld [vmem:[%s959 + $0x10] sm:$0xff]
          %v1065 = vld [vmem:[%s959 + $0x18] sm:$0xff]
          %v1066 = vpack.c.bf16 %v1063, %v1062
          %v1067 = vpack.c.bf16 %v1065, %v1064
          %v1068 = vld [vmem:[%s1] sm:$0xf]
          %vm1069 = vcmask 64512
          %v1071 = vsel %vm1069, %v1066, 0
          %v1074 = vsel %vm1069, %v1067, 0
          %vm1076 = vcmask 1043456
          %v1078 = vsel %vm1076, %v1068, 0
          %1080 = vmatprep.subr.bf16.mxu0 0
          %1081 = vmatpush1.bf16.msra.mxu0 0
          %1082 = vmatprep.subr.bf16.mxu0 0
          %1083 = vmatpush1.bf16.msra.mxu0 0
          %1084 = vmatprep.subr.bf16.mxu0 0
          %1085 = vmatpush1.bf16.msra.mxu0 0
          %1086 = vmatprep.subr.bf16.mxu0 0
          %1087 = vmatpush1.bf16.msra.mxu0 0
          %1088 = vmatprep.subr.bf16.mxu0 0
          %1089 = vmatpush1.bf16.msra.mxu0 0
          %1090 = vmatprep.subr.bf16.mxu0 0
          %1091 = vmatpush1.bf16.msra.mxu0 0
          %1092 = vmatprep.subr.bf16.mxu0 0
          %1093 = vmatpush1.bf16.msra.mxu0 0
          %1094 = vmatprep.subr.bf16.mxu0 0
          %1095 = vmatpush1.bf16.msra.mxu0 %v1078
          %1096 = vmatprep.subr.bf16.mxu0 0
          %1097 = vmatpush2.bf16.msra.mxu0 0
          %1098 = vmatprep.subr.bf16.mxu0 0
          %1099 = vmatpush2.bf16.msra.mxu0 0
          %1100 = vmatprep.subr.bf16.mxu0 0
          %1101 = vmatpush2.bf16.msra.mxu0 0
          %1102 = vmatprep.subr.bf16.mxu0 0
          %1103 = vmatpush2.bf16.msra.mxu0 0
          %1104 = vmatprep.subr.bf16.mxu0 0
          %1105 = vmatpush2.bf16.msra.mxu0 0
          %1106 = vmatprep.subr.bf16.mxu0 0
          %1107 = vmatpush2.bf16.msra.mxu0 0
          %1108 = vmatprep.subr.bf16.mxu0 0
          %1109 = vmatpush2.bf16.msra.mxu0 0
          %1110 = vmatprep.subr.bf16.mxu0 0
          %1111 = vmatpush2.bf16.msra.mxu0 0
          %1112 = vmatprep.mubr.bf16.mxu0 0
          %1113 = vmatmul.mubr.bf16.gmra.mxu0 %v1071
          %v1114 = vpop.f32.mrf.mxu0
          %v1115 = vadd.f32 0.0, %v1114
          %v1116 = vpop.f32.mrf.mxu0
          %v1117 = vpop.f32.mrf.mxu0
          %v1118 = vadd.f32 0.0, %v1117
          %v1119 = vpop.f32.mrf.mxu0
          %1120 = vmatprep.mubr.bf16.mxu0 0
          %1121 = vmatmul.mubr.bf16.gmra.mxu0 %v1074
          %v1122 = vpop.f32.mrf.mxu0
          %v1123 = vadd.f32 0.0, %v1122
          %v1124 = vpop.f32.mrf.mxu0
          %v1125 = vpop.f32.mrf.mxu0
          %v1126 = vadd.f32 0.0, %v1125
          %v1127 = vpop.f32.mrf.mxu0
          %1128 = vdwg.mxu0
          %v1129 = vld [vmem:[%s2] sm:$0x1]
          %v1131 = vlaneseq
          %v1132 = vshrl.u32 %v1131, 7
          %v1133 = vsub.s32 0, %v1132
          %v1134 = vrot.slane %v1129, %v1133
          %v1136 = vmul.f32 %v1115, %v1134
          %v1137 = vmul.f32 %v1118, %v1134
          %v1138 = vmul.f32 %v1123, %v1134
          %v1139 = vmul.f32 %v1126, %v1134
          %v1140 = vld [vmem:[#allocation3] sm:$0x1]
          %v1142 = vlaneseq
          %v1143 = vshrl.u32 %v1142, 7
          %v1144 = vsub.s32 0, %v1143
          %v1145 = vrot.slane %v1140, %v1144
          %v1147 = vadd.f32 %v1136, %v1145
          %v1148 = vadd.f32 %v1137, %v1145
          %v1149 = vadd.f32 %v1138, %v1145
          %v1150 = vadd.f32 %v1139, %v1145
          %v1151 = vmax.f32 %v1147, 0.0
          %v1152 = vmax.f32 %v1148, 0.0
          %v1153 = vmax.f32 %v1149, 0.0
          %v1154 = vmax.f32 %v1150, 0.0
          %v1155 = vpack.c.bf16 %v1152, %v1151
          %v1156 = vpack.c.bf16 %v1154, %v1153
          %v1157 = vld [vmem:[%s4] sm:$0xf]
          %v1158 = vld [vmem:[%s4 + $0x4] sm:$0xf]
          %v1159 = vld [vmem:[%s4 + $0x8] sm:$0xf]
          %v1160 = vld [vmem:[%s4 + $0xc] sm:$0xf]
          %v1161 = vld [vmem:[%s4 + $0x10] sm:$0xf]
          %v1162 = vld [vmem:[%s4 + $0x14] sm:$0xf]
          %v1163 = vld [vmem:[%s4 + $0x18] sm:$0xf]
          %v1164 = vld [vmem:[%s4 + $0x1c] sm:$0xf]
          %v1165 = vld [vmem:[%s4 + $0x20] sm:$0xf]
          %v1166 = vld [vmem:[%s4 + $0x24] sm:$0xf]
          %v1167 = vld [vmem:[%s4 + $0x28] sm:$0xf]
          %v1168 = vld [vmem:[%s4 + $0x2c] sm:$0xf]
          %v1169 = vld [vmem:[%s4 + $0x30] sm:$0xf]
          %v1170 = vld [vmem:[%s4 + $0x34] sm:$0xf]
          %v1171 = vld [vmem:[%s4 + $0x38] sm:$0xf]
          %v1172 = vld [vmem:[%s4 + $0x3c] sm:$0xf]
          %v1173 = vld [vmem:[#allocation7] sm:$0x1]
          %v1175 = vlaneseq
          %v1176 = vshrl.u32 %v1175, 7
          %v1177 = vsub.s32 0, %v1176
          %v1178 = vrot.slane %v1173, %v1177
          %v1196 = vunpack.c.l.b16 %v1157
          %v1197 = vunpack.c.l.b16 %v1158
          %v1198 = vunpack.c.l.b16 %v1159
          %v1199 = vunpack.c.l.b16 %v1160
          %v1200 = vunpack.c.l.b16 %v1161
          %v1201 = vunpack.c.l.b16 %v1162
          %v1202 = vunpack.c.l.b16 %v1163
          %v1203 = vunpack.c.l.b16 %v1164
          %v1204 = vunpack.c.l.b16 %v1165
          %v1205 = vunpack.c.l.b16 %v1166
          %v1206 = vunpack.c.l.b16 %v1167
          %v1207 = vunpack.c.l.b16 %v1168
          %v1208 = vunpack.c.l.b16 %v1169
          %v1209 = vunpack.c.l.b16 %v1170
          %v1210 = vunpack.c.l.b16 %v1171
          %v1211 = vunpack.c.l.b16 %v1172
          %v1212 = vpack.c.b16 %v1197, %v1196
          %v1213 = vpack.c.b16 %v1199, %v1198
          %v1214 = vpack.c.b16 %v1201, %v1200
          %v1215 = vpack.c.b16 %v1203, %v1202
          %v1216 = vpack.c.b16 %v1205, %v1204
          %v1217 = vpack.c.b16 %v1207, %v1206
          %v1218 = vpack.c.b16 %v1209, %v1208
          %v1219 = vpack.c.b16 %v1211, %v1210
          %1228 = vmatprep.subr.bf16.mxu0 0
          %1229 = vmatpush1.bf16.msra.mxu0 %v1219
          %1230 = vmatprep.subr.bf16.mxu0 0
          %1231 = vmatpush1.bf16.msra.mxu0 %v1218
          %1232 = vmatprep.subr.bf16.mxu0 0
          %1233 = vmatpush1.bf16.msra.mxu0 %v1217
          %1234 = vmatprep.subr.bf16.mxu0 0
          %1235 = vmatpush1.bf16.msra.mxu0 %v1216
          %1236 = vmatprep.subr.bf16.mxu0 0
          %1237 = vmatpush1.bf16.msra.mxu0 %v1215
          %1238 = vmatprep.subr.bf16.mxu0 0
          %1239 = vmatpush1.bf16.msra.mxu0 %v1214
          %1240 = vmatprep.subr.bf16.mxu0 0
          %1241 = vmatpush1.bf16.msra.mxu0 %v1213
          %1242 = vmatprep.subr.bf16.mxu0 0
          %1243 = vmatpush1.bf16.msra.mxu0 %v1212
          %1244 = vmatprep.subr.bf16.mxu0 0
          %1245 = vmatpush2.bf16.msra.mxu0 0
          %1246 = vmatprep.subr.bf16.mxu0 0
          %1247 = vmatpush2.bf16.msra.mxu0 0
          %1248 = vmatprep.subr.bf16.mxu0 0
          %1249 = vmatpush2.bf16.msra.mxu0 0
          %1250 = vmatprep.subr.bf16.mxu0 0
          %1251 = vmatpush2.bf16.msra.mxu0 0
          %1252 = vmatprep.subr.bf16.mxu0 0
          %1253 = vmatpush2.bf16.msra.mxu0 0
          %1254 = vmatprep.subr.bf16.mxu0 0
          %1255 = vmatpush2.bf16.msra.mxu0 0
          %1256 = vmatprep.subr.bf16.mxu0 0
          %1257 = vmatpush2.bf16.msra.mxu0 0
          %1258 = vmatprep.subr.bf16.mxu0 0
          %1259 = vmatpush2.bf16.msra.mxu0 0
          %1260 = vmatprep.mubr.bf16.mxu0 0
          %1261 = vmatmul.mubr.bf16.gmra.mxu0 %v1155
          %v1262 = vpop.f32.mrf.mxu0
          %v1263 = vadd.f32 %v1178, %v1262
          %v1264 = vpop.f32.mrf.mxu0
          %v1265 = vpop.f32.mrf.mxu0
          %v1266 = vadd.f32 %v1178, %v1265
          %v1267 = vpop.f32.mrf.mxu0
          %1268 = vmatprep.mubr.bf16.mxu0 0
          %1269 = vmatmul.mubr.bf16.gmra.mxu0 %v1156
          %v1270 = vpop.f32.mrf.mxu0
          %v1271 = vadd.f32 %v1178, %v1270
          %v1272 = vpop.f32.mrf.mxu0
          %v1273 = vpop.f32.mrf.mxu0
          %v1274 = vadd.f32 %v1178, %v1273
          %v1275 = vpop.f32.mrf.mxu0
          %1276 = vdwg.mxu0
          %1277 = vst [vmem:[#allocation2] sm:$0xff] %v1263
          %1278 = vst [vmem:[#allocation2 + $0x8] sm:$0xff] %v1266
          %1279 = vst [vmem:[#allocation2 + $0x10] sm:$0xff] %v1271
          %1280 = vst [vmem:[#allocation2 + $0x18] sm:$0xff] %v1274
        $region136: #{tpu_custom_call.1} parent=107 // pred_fallthru
          _
        %v1281 = vld [vmem:[#allocation2] sm:$0xff]
        %v1282 = vld [vmem:[#allocation2 + $0x8] sm:$0xff]
        %v1283 = vld [vmem:[#allocation2 + $0x10] sm:$0xff]
        %v1284 = vld [vmem:[#allocation2 + $0x18] sm:$0xff]
        %s1285 = smul.u32 %s45, 2
        %s1286 = sld [smem:[#allocation11 + %s1285]]
        %s1287 = sadd.s32 %s1285, 1
        %s1288 = sld [smem:[#allocation11 + %s1287]]
        %v1289 = vpack.c.bf16 %v1282, %v1281
        %v1290 = vpack.c.bf16 %v1284, %v1283
        %v1291 = vld [vmem:[%s965] sm:$0xf]
        %v1292 = vld [vmem:[%s965 + $0x4] sm:$0xf]
        %v1293 = vld [vmem:[%s965 + $0x8] sm:$0xf]
        %v1294 = vld [vmem:[%s965 + $0xc] sm:$0xf]
        %v1295 = vld [vmem:[%s965 + $0x10] sm:$0xf]
        %v1296 = vld [vmem:[%s965 + $0x14] sm:$0xf]
        %v1297 = vld [vmem:[%s965 + $0x18] sm:$0xf]
        %v1298 = vld [vmem:[%s965 + $0x1c] sm:$0xf]
        %v1299 = vld [vmem:[%s965 + $0x20] sm:$0xf]
        %v1300 = vld [vmem:[%s965 + $0x24] sm:$0xf]
        %v1301 = vld [vmem:[%s965 + $0x28] sm:$0xf]
        %v1302 = vld [vmem:[%s965 + $0x2c] sm:$0xf]
        %v1303 = vld [vmem:[%s965 + $0x30] sm:$0xf]
        %v1304 = vld [vmem:[%s965 + $0x34] sm:$0xf]
        %v1305 = vld [vmem:[%s965 + $0x38] sm:$0xf]
        %v1306 = vld [vmem:[%s965 + $0x3c] sm:$0xf]
        %v1307 = vld [vmem:[%s968] sm:$0x1]
        %v1309 = vlaneseq
        %v1310 = vshrl.u32 %v1309, 7
        %v1311 = vsub.s32 0, %v1310
        %v1312 = vrot.slane %v1307, %v1311
        %v1330 = vunpack.c.l.b16 %v1291
        %v1331 = vunpack.c.l.b16 %v1292
        %v1332 = vunpack.c.l.b16 %v1293
        %v1333 = vunpack.c.l.b16 %v1294
        %v1334 = vunpack.c.l.b16 %v1295
        %v1335 = vunpack.c.l.b16 %v1296
        %v1336 = vunpack.c.l.b16 %v1297
        %v1337 = vunpack.c.l.b16 %v1298
        %v1338 = vunpack.c.l.b16 %v1299
        %v1339 = vunpack.c.l.b16 %v1300
        %v1340 = vunpack.c.l.b16 %v1301
        %v1341 = vunpack.c.l.b16 %v1302
        %v1342 = vunpack.c.l.b16 %v1303
        %v1343 = vunpack.c.l.b16 %v1304
        %v1344 = vunpack.c.l.b16 %v1305
        %v1345 = vunpack.c.l.b16 %v1306
        %v1346 = vpack.c.b16 %v1331, %v1330
        %v1347 = vpack.c.b16 %v1333, %v1332
        %v1348 = vpack.c.b16 %v1335, %v1334
        %v1349 = vpack.c.b16 %v1337, %v1336
        %v1350 = vpack.c.b16 %v1339, %v1338
        %v1351 = vpack.c.b16 %v1341, %v1340
        %v1352 = vpack.c.b16 %v1343, %v1342
        %v1353 = vpack.c.b16 %v1345, %v1344
        %1362 = vmatprep.subr.bf16.mxu0 0
        %1363 = vmatpush1.bf16.msra.mxu0 %v1353
        %1364 = vmatprep.subr.bf16.mxu0 0
        %1365 = vmatpush1.bf16.msra.mxu0 %v1352
        %1366 = vmatprep.subr.bf16.mxu0 0
        %1367 = vmatpush1.bf16.msra.mxu0 %v1351
        %1368 = vmatprep.subr.bf16.mxu0 0
        %1369 = vmatpush1.bf16.msra.mxu0 %v1350
        %1370 = vmatprep.subr.bf16.mxu0 0
        %1371 = vmatpush1.bf16.msra.mxu0 %v1349
        %1372 = vmatprep.subr.bf16.mxu0 0
        %1373 = vmatpush1.bf16.msra.mxu0 %v1348
        %1374 = vmatprep.subr.bf16.mxu0 0
        %1375 = vmatpush1.bf16.msra.mxu0 %v1347
        %1376 = vmatprep.subr.bf16.mxu0 0
        %1377 = vmatpush1.bf16.msra.mxu0 %v1346
        %1378 = vmatprep.subr.bf16.mxu0 0
        %1379 = vmatpush2.bf16.msra.mxu0 0
        %1380 = vmatprep.subr.bf16.mxu0 0
        %1381 = vmatpush2.bf16.msra.mxu0 0
        %1382 = vmatprep.subr.bf16.mxu0 0
        %1383 = vmatpush2.bf16.msra.mxu0 0
        %1384 = vmatprep.subr.bf16.mxu0 0
        %1385 = vmatpush2.bf16.msra.mxu0 0
        %1386 = vmatprep.subr.bf16.mxu0 0
        %1387 = vmatpush2.bf16.msra.mxu0 0
        %1388 = vmatprep.subr.bf16.mxu0 0
        %1389 = vmatpush2.bf16.msra.mxu0 0
        %1390 = vmatprep.subr.bf16.mxu0 0
        %1391 = vmatpush2.bf16.msra.mxu0 0
        %1392 = vmatprep.subr.bf16.mxu0 0
        %1393 = vmatpush2.bf16.msra.mxu0 0
        %1394 = vmatprep.mubr.bf16.mxu0 0
        %1395 = vmatmul.mubr.bf16.gmra.mxu0 %v1289
        %v1396 = vpop.f32.mrf.mxu0
        %v1397 = vadd.f32 %v1312, %v1396
        %v1398 = vpop.f32.mrf.mxu0
        %v1399 = vpop.f32.mrf.mxu0
        %v1400 = vadd.f32 %v1312, %v1399
        %v1401 = vpop.f32.mrf.mxu0
        %1402 = vmatprep.mubr.bf16.mxu0 0
        %1403 = vmatmul.mubr.bf16.gmra.mxu0 %v1290
        %v1404 = vpop.f32.mrf.mxu0
        %v1405 = vadd.f32 %v1312, %v1404
        %v1406 = vpop.f32.mrf.mxu0
        %v1407 = vpop.f32.mrf.mxu0
        %v1408 = vadd.f32 %v1312, %v1407
        %v1409 = vpop.f32.mrf.mxu0
        %1410 = vdwg.mxu0
        %vm1411 = vcmp.gt.f32.partialorder %v1397, 0.0
        %vm1412 = vcmp.gt.f32.partialorder %v1400, 0.0
        %vm1413 = vcmp.gt.f32.partialorder %v1405, 0.0
        %vm1414 = vcmp.gt.f32.partialorder %v1408, 0.0
        %v1415 = vstv %s1286
        %v1416 = vmul.f32 %v1415, %v1397
        %v1417 = vmul.f32 %v1415, %v1400
        %v1418 = vmul.f32 %v1415, %v1405
        %v1419 = vmul.f32 %v1415, %v1408
        %v1420 = vsel %vm1411, %v1397, %v1416
        %v1421 = vsel %vm1412, %v1400, %v1417
        %v1422 = vsel %vm1413, %v1405, %v1418
        %v1423 = vsel %vm1414, %v1408, %v1419
        %v1424 = vld [vmem:[%s971] sm:$0x1]
        %v1426 = vlaneseq
        %v1427 = vshrl.u32 %v1426, 7
        %v1428 = vsub.s32 0, %v1427
        %v1429 = vrot.slane %v1424, %v1428
        %v1431 = vmul.f32 %v1420, %v1429
        %v1432 = vmul.f32 %v1421, %v1429
        %v1433 = vmul.f32 %v1422, %v1429
        %v1434 = vmul.f32 %v1423, %v1429
        %v1435 = vld [vmem:[%s974] sm:$0x1]
        %v1437 = vlaneseq
        %v1438 = vshrl.u32 %v1437, 7
        %v1439 = vsub.s32 0, %v1438
        %v1440 = vrot.slane %v1435, %v1439
        %v1442 = vadd.f32 %v1431, %v1440
        %v1443 = vadd.f32 %v1432, %v1440
        %v1444 = vadd.f32 %v1433, %v1440
        %v1445 = vadd.f32 %v1434, %v1440
        %s1446 = sld [smem:[#allocation12 + %s45]]
        %v1447 = vld [vmem:[%s978] sm:$0x7]
        %p1448 = scmp.eq.s32.totalorder %s1446, 0
        %s1449 = scalar_select %p1448, 1, 0
        %s1450 = scvt.s32.f32 %s1449
        %vm1451 = vcmp.ge.s32.totalorder %v1054, 1
        %vm1452 = vcmp.ge.s32.totalorder %v1055, 1
        %vm1453 = vcmp.ge.s32.totalorder %v1056, 1
        %vm1454 = vcmp.ge.s32.totalorder %v1057, 1
        %v1455 = vrot.slane %v1442, 7
        %v1456 = vrot.slane %v1443, 7
        %v1457 = vrot.slane %v1444, 7
        %v1458 = vrot.slane %v1445, 7
        %vm1459 = vcmp.lt.s32.totalorder %v1006, 1
        %v1460 = vsel %vm1459, %v1457, %v1458
        %v1461 = vsel %vm1459, %v1456, %v1457
        %v1462 = vsel %vm1459, %v1455, %v1456
        %v1463 = vsel %vm1459, %v1458, %v1455
        %v1464 = vsel %vm1451, 1, 0
        %v1465 = vsel %vm1452, 1, 0
        %v1466 = vsel %vm1453, 1, 0
        %v1467 = vsel %vm1454, 1, 0
        %vm1468 = vcmp.eq.s32.totalorder %v1464, 1
        %vm1469 = vcmp.eq.s32.totalorder %v1465, 1
        %vm1470 = vcmp.eq.s32.totalorder %v1466, 1
        %vm1471 = vcmp.eq.s32.totalorder %v1467, 1
        %v1472 = vsel %vm1468, %v1463, 0.0
        %v1473 = vsel %vm1469, %v1462, 0.0
        %v1474 = vsel %vm1470, %v1461, 0.0
        %v1475 = vsel %vm1471, %v1460, 0.0
        %vm1476 = vcmp.lt.s32.totalorder %v1054, 31
        %vm1477 = vcmp.lt.s32.totalorder %v1055, 31
        %vm1478 = vcmp.lt.s32.totalorder %v1056, 31
        %vm1479 = vcmp.lt.s32.totalorder %v1057, 31
        %v1480 = vrot.slane %v1442, 1
        %v1481 = vrot.slane %v1443, 1
        %v1482 = vrot.slane %v1444, 1
        %v1483 = vrot.slane %v1445, 1
        %vm1484 = vcmp.lt.s32.totalorder %v1006, 7
        %v1485 = vsel %vm1484, %v1482, %v1483
        %v1486 = vsel %vm1484, %v1481, %v1482
        %v1487 = vsel %vm1484, %v1480, %v1481
        %v1488 = vsel %vm1484, %v1483, %v1480
        %v1489 = vsel %vm1476, 1, 0
        %v1490 = vsel %vm1477, 1, 0
        %v1491 = vsel %vm1478, 1, 0
        %v1492 = vsel %vm1479, 1, 0
        %vm1493 = vcmp.eq.s32.totalorder %v1489, 1
        %vm1494 = vcmp.eq.s32.totalorder %v1490, 1
        %vm1495 = vcmp.eq.s32.totalorder %v1491, 1
        %vm1496 = vcmp.eq.s32.totalorder %v1492, 1
        %v1497 = vsel %vm1493, %v1487, 0.0
        %v1498 = vsel %vm1494, %v1486, 0.0
        %v1499 = vsel %vm1495, %v1485, 0.0
        %v1500 = vsel %vm1496, %v1488, 0.0
        %v1501 = vstv %s1450
        %v1502 = vmul.f32 %v1501, %v1472
        %v1503 = vmul.f32 %v1501, %v1473
        %v1504 = vmul.f32 %v1501, %v1474
        %v1505 = vmul.f32 %v1501, %v1475
        %v1506 = vadd.f32 %v1502, 0.0
        %v1507 = vadd.f32 %v1503, 0.0
        %v1508 = vadd.f32 %v1504, 0.0
        %v1509 = vadd.f32 %v1505, 0.0
        %v1510 = vmul.f32 %v1501, %v1497
        %v1511 = vmul.f32 %v1501, %v1498
        %v1512 = vmul.f32 %v1501, %v1499
        %v1513 = vmul.f32 %v1501, %v1500
        %v1514 = vadd.f32 %v1510, 0.0
        %v1515 = vadd.f32 %v1511, 0.0
        %v1516 = vadd.f32 %v1512, 0.0
        %v1517 = vadd.f32 %v1513, 0.0
        %p1518 = scmp.eq.s32.totalorder %s1446, 1
        %s1519 = scalar_select %p1518, 1, 0
        %s1520 = scvt.s32.f32 %s1519
        %vm1521 = vcmp.ge.s32.totalorder %v1054, 2
        %vm1522 = vcmp.ge.s32.totalorder %v1055, 2
        %vm1523 = vcmp.ge.s32.totalorder %v1056, 2
        %vm1524 = vcmp.ge.s32.totalorder %v1057, 2
        %v1525 = vrot.slane %v1442, 6
        %v1526 = vrot.slane %v1443, 6
        %v1527 = vrot.slane %v1444, 6
        %v1528 = vrot.slane %v1445, 6
        %vm1529 = vcmp.lt.s32.totalorder %v1006, 2
        %v1530 = vsel %vm1529, %v1527, %v1528
        %v1531 = vsel %vm1529, %v1526, %v1527
        %v1532 = vsel %vm1529, %v1525, %v1526
        %v1533 = vsel %vm1529, %v1528, %v1525
        %v1534 = vsel %vm1521, 1, 0
        %v1535 = vsel %vm1522, 1, 0
        %v1536 = vsel %vm1523, 1, 0
        %v1537 = vsel %vm1524, 1, 0
        %vm1538 = vcmp.eq.s32.totalorder %v1534, 1
        %vm1539 = vcmp.eq.s32.totalorder %v1535, 1
        %vm1540 = vcmp.eq.s32.totalorder %v1536, 1
        %vm1541 = vcmp.eq.s32.totalorder %v1537, 1
        %v1542 = vsel %vm1538, %v1533, 0.0
        %v1543 = vsel %vm1539, %v1532, 0.0
        %v1544 = vsel %vm1540, %v1531, 0.0
        %v1545 = vsel %vm1541, %v1530, 0.0
        %vm1546 = vcmp.lt.s32.totalorder %v1054, 30
        %vm1547 = vcmp.lt.s32.totalorder %v1055, 30
        %vm1548 = vcmp.lt.s32.totalorder %v1056, 30
        %vm1549 = vcmp.lt.s32.totalorder %v1057, 30
        %v1550 = vrot.slane %v1442, 2
        %v1551 = vrot.slane %v1443, 2
        %v1552 = vrot.slane %v1444, 2
        %v1553 = vrot.slane %v1445, 2
        %vm1554 = vcmp.lt.s32.totalorder %v1006, 6
        %v1555 = vsel %vm1554, %v1552, %v1553
        %v1556 = vsel %vm1554, %v1551, %v1552
        %v1557 = vsel %vm1554, %v1550, %v1551
        %v1558 = vsel %vm1554, %v1553, %v1550
        %v1559 = vsel %vm1546, 1, 0
        %v1560 = vsel %vm1547, 1, 0
        %v1561 = vsel %vm1548, 1, 0
        %v1562 = vsel %vm1549, 1, 0
        %vm1563 = vcmp.eq.s32.totalorder %v1559, 1
        %vm1564 = vcmp.eq.s32.totalorder %v1560, 1
        %vm1565 = vcmp.eq.s32.totalorder %v1561, 1
        %vm1566 = vcmp.eq.s32.totalorder %v1562, 1
        %v1567 = vsel %vm1563, %v1557, 0.0
        %v1568 = vsel %vm1564, %v1556, 0.0
        %v1569 = vsel %vm1565, %v1555, 0.0
        %v1570 = vsel %vm1566, %v1558, 0.0
        %v1571 = vstv %s1520
        %v1572 = vmul.f32 %v1571, %v1542
        %v1573 = vmul.f32 %v1571, %v1543
        %v1574 = vmul.f32 %v1571, %v1544
        %v1575 = vmul.f32 %v1571, %v1545
        %v1576 = vadd.f32 %v1506, %v1572
        %v1577 = vadd.f32 %v1507, %v1573
        %v1578 = vadd.f32 %v1508, %v1574
        %v1579 = vadd.f32 %v1509, %v1575
        %v1580 = vmul.f32 %v1571, %v1567
        %v1581 = vmul.f32 %v1571, %v1568
        %v1582 = vmul.f32 %v1571, %v1569
        %v1583 = vmul.f32 %v1571, %v1570
        %v1584 = vadd.f32 %v1514, %v1580
        %v1585 = vadd.f32 %v1515, %v1581
        %v1586 = vadd.f32 %v1516, %v1582
        %v1587 = vadd.f32 %v1517, %v1583
        %v1588 = vlaneseq
        %v1589 = vshrl.u32 %v1588, 7
        %v1590 = vsub.s32 0, %v1589
        %v1591 = vrot.slane %v1447, %v1590
        %v1592 = vmul.f32 %v1591, %v1576
        %v1593 = vmul.f32 %v1591, %v1577
        %v1594 = vmul.f32 %v1591, %v1578
        %v1595 = vmul.f32 %v1591, %v1579
        %v1596 = vlaneseq
        %v1597 = vshrl.u32 %v1596, 7
        %v1598 = vsub.s32 1, %v1597
        %v1599 = vrot.slane %v1447, %v1598
        %v1600 = vmul.f32 %v1599, %v1442
        %v1601 = vmul.f32 %v1599, %v1443
        %v1602 = vmul.f32 %v1599, %v1444
        %v1603 = vmul.f32 %v1599, %v1445
        %v1604 = vadd.f32 %v1592, %v1600
        %v1605 = vadd.f32 %v1593, %v1601
        %v1606 = vadd.f32 %v1594, %v1602
        %v1607 = vadd.f32 %v1595, %v1603
        %v1608 = vlaneseq
        %v1609 = vshrl.u32 %v1608, 7
        %v1610 = vsub.s32 2, %v1609
        %v1611 = vrot.slane %v1447, %v1610
        %v1612 = vmul.f32 %v1611, %v1584
        %v1613 = vmul.f32 %v1611, %v1585
        %v1614 = vmul.f32 %v1611, %v1586
        %v1615 = vmul.f32 %v1611, %v1587
        %v1616 = vadd.f32 %v1604, %v1612
        %v1617 = vadd.f32 %v1605, %v1613
        %v1618 = vadd.f32 %v1606, %v1614
        %v1619 = vadd.f32 %v1607, %v1615
        %v1620 = vld [vmem:[%s981] sm:$0x1]
        %v1622 = vlaneseq
        %v1623 = vshrl.u32 %v1622, 7
        %v1624 = vsub.s32 0, %v1623
        %v1625 = vrot.slane %v1620, %v1624
        %v1627 = vadd.f32 %v1616, %v1625
        %v1628 = vadd.f32 %v1617, %v1625
        %v1629 = vadd.f32 %v1618, %v1625
        %v1630 = vadd.f32 %v1619, %v1625
        %vm1631 = vcmp.gt.f32.partialorder %v1627, 0.0
        %vm1632 = vcmp.gt.f32.partialorder %v1628, 0.0
        %vm1633 = vcmp.gt.f32.partialorder %v1629, 0.0
        %vm1634 = vcmp.gt.f32.partialorder %v1630, 0.0
        %v1635 = vstv %s1288
        %v1636 = vmul.f32 %v1635, %v1627
        %v1637 = vmul.f32 %v1635, %v1628
        %v1638 = vmul.f32 %v1635, %v1629
        %v1639 = vmul.f32 %v1635, %v1630
        %v1640 = vsel %vm1631, %v1627, %v1636
        %v1641 = vsel %vm1632, %v1628, %v1637
        %v1642 = vsel %vm1633, %v1629, %v1638
        %v1643 = vsel %vm1634, %v1630, %v1639
        %v1644 = vld [vmem:[%s984] sm:$0x1]
        %v1646 = vlaneseq
        %v1647 = vshrl.u32 %v1646, 7
        %v1648 = vsub.s32 0, %v1647
        %v1649 = vrot.slane %v1644, %v1648
        %v1651 = vmul.f32 %v1640, %v1649
        %v1652 = vmul.f32 %v1641, %v1649
        %v1653 = vmul.f32 %v1642, %v1649
        %v1654 = vmul.f32 %v1643, %v1649
        %v1655 = vld [vmem:[%s987] sm:$0x1]
        %v1657 = vlaneseq
        %v1658 = vshrl.u32 %v1657, 7
        %v1659 = vsub.s32 0, %v1658
        %v1660 = vrot.slane %v1655, %v1659
        %v1662 = vadd.f32 %v1651, %v1660
        %v1663 = vadd.f32 %v1652, %v1660
        %v1664 = vadd.f32 %v1653, %v1660
        %v1665 = vadd.f32 %v1654, %v1660
        %v1666 = vpack.c.bf16 %v1663, %v1662
        %v1667 = vpack.c.bf16 %v1665, %v1664
        %v1668 = vld [vmem:[%s826] sm:$0xf]
        %v1669 = vld [vmem:[%s826 + $0x4] sm:$0xf]
        %v1670 = vld [vmem:[%s826 + $0x8] sm:$0xf]
        %v1671 = vld [vmem:[%s826 + $0xc] sm:$0xf]
        %v1672 = vld [vmem:[%s826 + $0x10] sm:$0xf]
        %v1673 = vld [vmem:[%s826 + $0x14] sm:$0xf]
        %v1674 = vld [vmem:[%s826 + $0x18] sm:$0xf]
        %v1675 = vld [vmem:[%s826 + $0x1c] sm:$0xf]
        %v1676 = vld [vmem:[%s826 + $0x20] sm:$0xf]
        %v1677 = vld [vmem:[%s826 + $0x24] sm:$0xf]
        %v1678 = vld [vmem:[%s826 + $0x28] sm:$0xf]
        %v1679 = vld [vmem:[%s826 + $0x2c] sm:$0xf]
        %v1680 = vld [vmem:[%s826 + $0x30] sm:$0xf]
        %v1681 = vld [vmem:[%s826 + $0x34] sm:$0xf]
        %v1682 = vld [vmem:[%s826 + $0x38] sm:$0xf]
        %v1683 = vld [vmem:[%s826 + $0x3c] sm:$0xf]
        %v1684 = vld [vmem:[%s990] sm:$0x1]
        %v1686 = vlaneseq
        %v1687 = vshrl.u32 %v1686, 7
        %v1688 = vsub.s32 0, %v1687
        %v1689 = vrot.slane %v1684, %v1688
        %v1707 = vunpack.c.l.b16 %v1668
        %v1708 = vunpack.c.l.b16 %v1669
        %v1709 = vunpack.c.l.b16 %v1670
        %v1710 = vunpack.c.l.b16 %v1671
        %v1711 = vunpack.c.l.b16 %v1672
        %v1712 = vunpack.c.l.b16 %v1673
        %v1713 = vunpack.c.l.b16 %v1674
        %v1714 = vunpack.c.l.b16 %v1675
        %v1715 = vunpack.c.l.b16 %v1676
        %v1716 = vunpack.c.l.b16 %v1677
        %v1717 = vunpack.c.l.b16 %v1678
        %v1718 = vunpack.c.l.b16 %v1679
        %v1719 = vunpack.c.l.b16 %v1680
        %v1720 = vunpack.c.l.b16 %v1681
        %v1721 = vunpack.c.l.b16 %v1682
        %v1722 = vunpack.c.l.b16 %v1683
        %v1723 = vpack.c.b16 %v1708, %v1707
        %v1724 = vpack.c.b16 %v1710, %v1709
        %v1725 = vpack.c.b16 %v1712, %v1711
        %v1726 = vpack.c.b16 %v1714, %v1713
        %v1727 = vpack.c.b16 %v1716, %v1715
        %v1728 = vpack.c.b16 %v1718, %v1717
        %v1729 = vpack.c.b16 %v1720, %v1719
        %v1730 = vpack.c.b16 %v1722, %v1721
        %1739 = vmatprep.subr.bf16.mxu0 0
        %1740 = vmatpush1.bf16.msra.mxu0 %v1730
        %1741 = vmatprep.subr.bf16.mxu0 0
        %1742 = vmatpush1.bf16.msra.mxu0 %v1729
        %1743 = vmatprep.subr.bf16.mxu0 0
        %1744 = vmatpush1.bf16.msra.mxu0 %v1728
        %1745 = vmatprep.subr.bf16.mxu0 0
        %1746 = vmatpush1.bf16.msra.mxu0 %v1727
        %1747 = vmatprep.subr.bf16.mxu0 0
        %1748 = vmatpush1.bf16.msra.mxu0 %v1726
        %1749 = vmatprep.subr.bf16.mxu0 0
        %1750 = vmatpush1.bf16.msra.mxu0 %v1725
        %1751 = vmatprep.subr.bf16.mxu0 0
        %1752 = vmatpush1.bf16.msra.mxu0 %v1724
        %1753 = vmatprep.subr.bf16.mxu0 0
        %1754 = vmatpush1.bf16.msra.mxu0 %v1723
        %1755 = vmatprep.subr.bf16.mxu0 0
        %1756 = vmatpush2.bf16.msra.mxu0 0
        %1757 = vmatprep.subr.bf16.mxu0 0
        %1758 = vmatpush2.bf16.msra.mxu0 0
        %1759 = vmatprep.subr.bf16.mxu0 0
        %1760 = vmatpush2.bf16.msra.mxu0 0
        %1761 = vmatprep.subr.bf16.mxu0 0
        %1762 = vmatpush2.bf16.msra.mxu0 0
        %1763 = vmatprep.subr.bf16.mxu0 0
        %1764 = vmatpush2.bf16.msra.mxu0 0
        %1765 = vmatprep.subr.bf16.mxu0 0
        %1766 = vmatpush2.bf16.msra.mxu0 0
        %1767 = vmatprep.subr.bf16.mxu0 0
        %1768 = vmatpush2.bf16.msra.mxu0 0
        %1769 = vmatprep.subr.bf16.mxu0 0
        %1770 = vmatpush2.bf16.msra.mxu0 0
        %1771 = vmatprep.mubr.bf16.mxu0 0
        %1772 = vmatmul.mubr.bf16.gmra.mxu0 %v1666
        %v1773 = vpop.f32.mrf.mxu0
        %v1774 = vadd.f32 %v1689, %v1773
        %v1775 = vpop.f32.mrf.mxu0
        %v1776 = vpop.f32.mrf.mxu0
        %v1777 = vadd.f32 %v1689, %v1776
        %v1778 = vpop.f32.mrf.mxu0
        %1779 = vmatprep.mubr.bf16.mxu0 0
        %1780 = vmatmul.mubr.bf16.gmra.mxu0 %v1667
        %v1781 = vpop.f32.mrf.mxu0
        %v1782 = vadd.f32 %v1689, %v1781
        %v1783 = vpop.f32.mrf.mxu0
        %v1784 = vpop.f32.mrf.mxu0
        %v1785 = vadd.f32 %v1689, %v1784
        %v1786 = vpop.f32.mrf.mxu0
        %1787 = vdwg.mxu0
        %v1788 = vadd.f32 %v1774, %v1777
        %v1789 = vadd.f32 %v1788, %v1782
        %v1790 = vadd.f32 %v1789, %v1785
        %v1791 = vrot.slane %v1790, 4
        %v1792 = vadd.f32 %v1790, %v1791
        %v1793 = vrot.slane %v1792, 2
        %v1794 = vadd.f32 %v1792, %v1793
        %v1795 = vrot.slane %v1794, 1
        %v1796 = vadd.f32 %v1794, %v1795
        %v1797 = vrcp.pop 32.0
        %v1798 = vmul.f32 %v1796, %v1797
        %v1799 = vpack.c.bf16 %v1798, %v1798
        %v1800 = vld [vmem:[%s995] sm:$0xf]
        %v1801 = vld [vmem:[%s995 + $0x4] sm:$0xf]
        %v1802 = vld [vmem:[%s995 + $0x8] sm:$0xf]
        %v1803 = vld [vmem:[%s995 + $0xc] sm:$0xf]
        %v1804 = vld [vmem:[%s995 + $0x10] sm:$0xf]
        %v1805 = vld [vmem:[%s995 + $0x14] sm:$0xf]
        %v1806 = vld [vmem:[%s995 + $0x18] sm:$0xf]
        %v1807 = vld [vmem:[%s995 + $0x1c] sm:$0xf]
        %v1808 = vld [vmem:[%s995 + $0x20] sm:$0xf]
        %v1809 = vld [vmem:[%s995 + $0x24] sm:$0xf]
        %v1810 = vld [vmem:[%s995 + $0x28] sm:$0xf]
        %v1811 = vld [vmem:[%s995 + $0x2c] sm:$0xf]
        %v1812 = vld [vmem:[%s995 + $0x30] sm:$0xf]
        %v1813 = vld [vmem:[%s995 + $0x34] sm:$0xf]
        %v1814 = vld [vmem:[%s995 + $0x38] sm:$0xf]
        %v1815 = vld [vmem:[%s995 + $0x3c] sm:$0xf]
        %v1816 = vld [vmem:[%s834] sm:$0x1]
        %v1833 = vunpack.c.l.b16 %v1800
        %v1834 = vunpack.c.l.b16 %v1801
        %v1835 = vunpack.c.l.b16 %v1802
        %v1836 = vunpack.c.l.b16 %v1803
        %v1837 = vunpack.c.l.b16 %v1804
        %v1838 = vunpack.c.l.b16 %v1805
        %v1839 = vunpack.c.l.b16 %v1806
        %v1840 = vunpack.c.l.b16 %v1807
        %v1841 = vunpack.c.l.b16 %v1808
        %v1842 = vunpack.c.l.b16 %v1809
        %v1843 = vunpack.c.l.b16 %v1810
        %v1844 = vunpack.c.l.b16 %v1811
        %v1845 = vunpack.c.l.b16 %v1812
        %v1846 = vunpack.c.l.b16 %v1813
        %v1847 = vunpack.c.l.b16 %v1814
        %v1848 = vunpack.c.l.b16 %v1815
        %v1849 = vpack.c.b16 %v1834, %v1833
        %v1850 = vpack.c.b16 %v1836, %v1835
        %v1851 = vpack.c.b16 %v1838, %v1837
        %v1852 = vpack.c.b16 %v1840, %v1839
        %v1853 = vpack.c.b16 %v1842, %v1841
        %v1854 = vpack.c.b16 %v1844, %v1843
        %v1855 = vpack.c.b16 %v1846, %v1845
        %v1856 = vpack.c.b16 %v1848, %v1847
        %1865 = vmatprep.subr.bf16.mxu0 0
        %1866 = vmatpush1.bf16.msra.mxu0 %v1856
        %1867 = vmatprep.subr.bf16.mxu0 0
        %1868 = vmatpush1.bf16.msra.mxu0 %v1855
        %1869 = vmatprep.subr.bf16.mxu0 0
        %1870 = vmatpush1.bf16.msra.mxu0 %v1854
        %1871 = vmatprep.subr.bf16.mxu0 0
        %1872 = vmatpush1.bf16.msra.mxu0 %v1853
        %1873 = vmatprep.subr.bf16.mxu0 0
        %1874 = vmatpush1.bf16.msra.mxu0 %v1852
        %1875 = vmatprep.subr.bf16.mxu0 0
        %1876 = vmatpush1.bf16.msra.mxu0 %v1851
        %1877 = vmatprep.subr.bf16.mxu0 0
        %1878 = vmatpush1.bf16.msra.mxu0 %v1850
        %1879 = vmatprep.subr.bf16.mxu0 0
        %1880 = vmatpush1.bf16.msra.mxu0 %v1849
        %1881 = vmatprep.subr.bf16.mxu0 0
        %1882 = vmatpush2.bf16.msra.mxu0 0
        %1883 = vmatprep.subr.bf16.mxu0 0
        %1884 = vmatpush2.bf16.msra.mxu0 0
        %1885 = vmatprep.subr.bf16.mxu0 0
        %1886 = vmatpush2.bf16.msra.mxu0 0
        %1887 = vmatprep.subr.bf16.mxu0 0
        %1888 = vmatpush2.bf16.msra.mxu0 0
        %1889 = vmatprep.subr.bf16.mxu0 0
        %1890 = vmatpush2.bf16.msra.mxu0 0
        %1891 = vmatprep.subr.bf16.mxu0 0
        %1892 = vmatpush2.bf16.msra.mxu0 0
        %1893 = vmatprep.subr.bf16.mxu0 0
        %1894 = vmatpush2.bf16.msra.mxu0 0
        %1895 = vmatprep.subr.bf16.mxu0 0
        %1896 = vmatpush2.bf16.msra.mxu0 0
        %1897 = vmatprep.mubr.bf16.mxu0 0
        %1898 = vmatmul.mubr.bf16.gmra.mxu0 %v1799
        %v1899 = vpop.f32.mrf.mxu0
        %v1900 = vadd.f32 %v1816, %v1899
        %v1901 = vpop.f32.mrf.mxu0
        %v1902 = vpop.f32.mrf.mxu0
        %v1903 = vpop.f32.mrf.mxu0
        %1904 = vdwg.mxu0
        %v1905 = vmax.f32 %v1900, 0.0
        %v1906 = vpack.c.bf16 %v1905, %v1905
        %v1907 = vld [vmem:[%s999] sm:$0xf]
        %v1908 = vld [vmem:[%s1002] sm:$0x1]
        %vm1909 = vcmask 64512
        %v1911 = vsel %vm1909, %v1906, 0
        %vm1913 = vcmask 1043456
        %v1915 = vsel %vm1913, %v1907, 0
        %1917 = vmatprep.subr.bf16.mxu0 0
        %1918 = vmatpush1.bf16.msra.mxu0 0
        %1919 = vmatprep.subr.bf16.mxu0 0
        %1920 = vmatpush1.bf16.msra.mxu0 0
        %1921 = vmatprep.subr.bf16.mxu0 0
        %1922 = vmatpush1.bf16.msra.mxu0 0
        %1923 = vmatprep.subr.bf16.mxu0 0
        %1924 = vmatpush1.bf16.msra.mxu0 0
        %1925 = vmatprep.subr.bf16.mxu0 0
        %1926 = vmatpush1.bf16.msra.mxu0 0
        %1927 = vmatprep.subr.bf16.mxu0 0
        %1928 = vmatpush1.bf16.msra.mxu0 0
        %1929 = vmatprep.subr.bf16.mxu0 0
        %1930 = vmatpush1.bf16.msra.mxu0 0
        %1931 = vmatprep.subr.bf16.mxu0 0
        %1932 = vmatpush1.bf16.msra.mxu0 %v1915
        %1933 = vmatprep.subr.bf16.mxu0 0
        %1934 = vmatpush2.bf16.msra.mxu0 0
        %1935 = vmatprep.subr.bf16.mxu0 0
        %1936 = vmatpush2.bf16.msra.mxu0 0
        %1937 = vmatprep.subr.bf16.mxu0 0
        %1938 = vmatpush2.bf16.msra.mxu0 0
        %1939 = vmatprep.subr.bf16.mxu0 0
        %1940 = vmatpush2.bf16.msra.mxu0 0
        %1941 = vmatprep.subr.bf16.mxu0 0
        %1942 = vmatpush2.bf16.msra.mxu0 0
        %1943 = vmatprep.subr.bf16.mxu0 0
        %1944 = vmatpush2.bf16.msra.mxu0 0
        %1945 = vmatprep.subr.bf16.mxu0 0
        %1946 = vmatpush2.bf16.msra.mxu0 0
        %1947 = vmatprep.subr.bf16.mxu0 0
        %1948 = vmatpush2.bf16.msra.mxu0 0
        %1949 = vmatprep.mubr.bf16.mxu0 0
        %1950 = vmatmul.mubr.bf16.gmra.mxu0 %v1911
        %v1951 = vpop.f32.mrf.mxu0
        %v1952 = vadd.f32 %v1908, %v1951
        %v1953 = vpop.f32.mrf.mxu0
        %v1954 = vpop.f32.mrf.mxu0
        %v1955 = vpop.f32.mrf.mxu0
        %1956 = vdwg.mxu0
        %v1957 = vxor.u32 %v1952, 2147483648
        %v1958 = vmul.f32 %v1957, 1.442695
        %v1959 = vpow.pop %v1958
        %v1960 = vadd.f32 %v1959, 1.0
        %v1961 = vrcp.pop %v1960
        %v1962 = vmul.f32 1.0, %v1961
        %v1963 = vlaneseq
        %v1964 = vshrl.u32 %v1963, 7
        %v1965 = vsub.s32 0, %v1964
        %v1966 = vrot.slane %v1962, %v1965
        %v1967 = vmul.f32 %v1774, %v1966
        %v1968 = vmul.f32 %v1777, %v1966
        %v1969 = vmul.f32 %v1782, %v1966
        %v1970 = vmul.f32 %v1785, %v1966
        %v1971 = vadd.f32 %v1281, %v1967
        %v1972 = vadd.f32 %v1282, %v1968
        %v1973 = vadd.f32 %v1283, %v1969
        %v1974 = vadd.f32 %v1284, %v1970
        %v1975 = vmax.f32 %v1971, 0.0
        %v1976 = vmax.f32 %v1972, 0.0
        %v1977 = vmax.f32 %v1973, 0.0
        %v1978 = vmax.f32 %v1974, 0.0
        %1979 = vst [vmem:[#allocation2] sm:$0xff] %v1975
        %1980 = vst [vmem:[#allocation2 + $0x8] sm:$0xff] %v1976
        %1981 = vst [vmem:[#allocation2 + $0x10] sm:$0xff] %v1977
        %1982 = vst [vmem:[#allocation2 + $0x18] sm:$0xff] %v1978
        %p1983 = scmp.eq.s32.totalorder %s45, 3
        // Predicated region
        $region137: #{tpu_custom_call.1} parent=107 // pred_check
          %p1984 = pneg %p1983
        $region138: #{tpu_custom_call.1} parent=107 // pred_check_branch
          %1986 = sbr.rel (%p1984) target = $region140
        $region139: #{tpu_custom_call.1} parent=107 // pred_region
          %v1987 = vlaneseq
          %v1988 = vand.u32 %v1987, 127
          %vm1989 = vcmp.lt.s32.totalorder %v1988, 16
          %v1990 = vsel %vm1989, 1, 0
          %v1991 = vcvt.s32.f32 %v1990
          %1992 = vadd.xlane.f32.xlu0 %v1975
          %v1993 = vpop.xlane.xlu0 %1992
          %1994 = vadd.xlane.f32.xlu0 %v1976
          %v1995 = vpop.xlane.xlu0 %1994
          %1996 = vadd.xlane.f32.xlu0 %v1977
          %v1997 = vpop.xlane.xlu0 %1996
          %1998 = vadd.xlane.f32.xlu0 %v1978
          %v1999 = vpop.xlane.xlu0 %1998
          %v2000 = vadd.f32 %v1993, %v1995
          %v2001 = vadd.f32 %v2000, %v1997
          %v2002 = vadd.f32 %v2001, %v1999
          %v2003 = vrot.slane %v2002, 4
          %v2004 = vadd.f32 %v2002, %v2003
          %v2005 = vrot.slane %v2004, 2
          %v2006 = vadd.f32 %v2004, %v2005
          %v2007 = vrot.slane %v2006, 1
          %v2008 = vadd.f32 %v2006, %v2007
          %v2009 = vmul.f32 %v2008, 0.001953125
          %v2010 = vsub.f32 %v1975, %v2009
          %v2011 = vsub.f32 %v1976, %v2009
          %v2012 = vsub.f32 %v1977, %v2009
          %v2013 = vsub.f32 %v1978, %v2009
          %v2014 = vmul.f32 %v2010, %v1991
          %v2015 = vmul.f32 %v2011, %v1991
          %v2016 = vmul.f32 %v2012, %v1991
          %v2017 = vmul.f32 %v2013, %v1991
          %v2018 = vmul.f32 %v2014, %v2014
          %v2019 = vmul.f32 %v2015, %v2015
          %v2020 = vmul.f32 %v2016, %v2016
          %v2021 = vmul.f32 %v2017, %v2017
          %2022 = vadd.xlane.f32.xlu0 %v2018
          %v2023 = vpop.xlane.xlu0 %2022
          %2024 = vadd.xlane.f32.xlu0 %v2019
          %v2025 = vpop.xlane.xlu0 %2024
          %2026 = vadd.xlane.f32.xlu0 %v2020
          %v2027 = vpop.xlane.xlu0 %2026
          %2028 = vadd.xlane.f32.xlu0 %v2021
          %v2029 = vpop.xlane.xlu0 %2028
          %v2030 = vadd.f32 %v2023, %v2025
          %v2031 = vadd.f32 %v2030, %v2027
          %v2032 = vadd.f32 %v2031, %v2029
          %v2033 = vrot.slane %v2032, 4
          %v2034 = vadd.f32 %v2032, %v2033
          %v2035 = vrot.slane %v2034, 2
          %v2036 = vadd.f32 %v2034, %v2035
          %v2037 = vrot.slane %v2036, 1
          %v2038 = vadd.f32 %v2036, %v2037
          %v2039 = vmul.f32 %v2038, 0.001953125
          %v2040 = vadd.f32 %v2039, 1e-05
          %v2041 = vrsqrt.pop %v2040
          %v2042 = vmul.f32 %v2014, %v2041
          %v2043 = vmul.f32 %v2015, %v2041
          %v2044 = vmul.f32 %v2016, %v2041
          %v2045 = vmul.f32 %v2017, %v2041
          %2046 = vst [vmem:[%s954] sm:$0xff] %v2042
          %2047 = vst [vmem:[%s954 + $0x8] sm:$0xff] %v2043
          %2048 = vst [vmem:[%s954 + $0x10] sm:$0xff] %v2044
          %2049 = vst [vmem:[%s954 + $0x18] sm:$0xff] %v2045
        $region140: #{tpu_custom_call.1} parent=107 // pred_fallthru
          _
        %s2050 = sand.u32 %s597, 1
        %s2051 = scalar_lea.sflag [#allocation5], %s2050
        %s2052 = sand.u32 %s597, 1
        %s2053 = smul.addr %s2052, 32
        %s2054 = scalar_lea.vmem [#allocation14], %s2053
        // Predicated region
        $region141: #{tpu_custom_call.1} parent=107 // pred_check
          %p2055 = pneg %p607
        $region142: #{tpu_custom_call.1} parent=107 // pred_check_branch
          %2057 = sbr.rel (%p2055) target = $region144
        $region143: #{tpu_custom_call.1} parent=107 // pred_region
          %s2058 = smul.u32 4, %s44
          %s2060 = ssub.s32 512, 512
          %2061 = vsyncadd %s2051, %s2060
          %s2062 = smul.addr %s2058, 128
          %s2063 = scalar_lea.hbm %s22, %s2062
          %s2064 = sshll.u32 %s2054, 4
          %s2065 = int_to_ptr.vmem [resolvable:$true] %s2064
          %2070 = dma.vmem_to_hbm [thread:$0]  %s2065, 512, %s2063, %s2051, 128, 128, 8
        $region144: #{tpu_custom_call.1} parent=107 // pred_fallthru
          _
      $region108: #{tpu_custom_call.1} parent=5 // pred_fallthru
        _
      %p2071 = scmp.le.s32.totalorder 2, %s35
      // Predicated region
      $region145: #{tpu_custom_call.1} parent=5 // pred_check
        %p2072 = pneg %p2071
      $region146: #{tpu_custom_call.1} parent=5 // pred_check_branch
        %2074 = sbr.rel (%p2072) target = $region148
      $region147: #{tpu_custom_call.1} parent=5 // pred_region
        %s2075 = ssub.s32 %s35, 2
        // Predicated region
        $region149: #{tpu_custom_call.1} parent=147 // pred_check
          %p2076 = pneg %p613
        $region150: #{tpu_custom_call.1} parent=147 // pred_check_branch
          %2078 = sbr.rel (%p2076) target = $region152
        $region151: #{tpu_custom_call.1} parent=147 // pred_region
          %s2079 = sand.u32 %s598, 1
          %s2080 = scalar_lea.sflag [#allocation5], %s2079
          %s2081 = sand.u32 %s598, 1
          %s2082 = smul.addr %s2081, 32
          %s2083 = scalar_lea.vmem [#allocation14], %s2082
          %2084 = dma.done %s2080, 512
        $region152: #{tpu_custom_call.1} parent=147 // pred_fallthru
          _
      $region148: #{tpu_custom_call.1} parent=5 // pred_fallthru
        _
    $region6: #{tpu_custom_call.1} parent=1 // loop_footer
      %s39 = sadd.s32 1, %s35
    $region7: #{tpu_custom_call.1} parent=1 // loop_footer_branch
      %34 = sbr.rel target = $region3
    $region8: #{tpu_custom_call.1} parent=1 // loop_exit
      _
    %2085 = vsyncpa [#allocation4], 1
    %s2086 = scalar_lea.sflag [#allocation4], 1
    %2087 = vsyncpa %s2086, 1
    %2088 = vsyncpa [#allocation8], 1
    %2089 = vsyncpa [#allocation5], 1
    %s2090 = scalar_lea.sflag [#allocation5], 1
    %2091 = vsyncpa %s2090, 1
    %2092 = vsyncpa [#allocation6], 1
    %s2093 = scalar_lea.sflag [#allocation6], 1
    %2094 = vsyncpa %s2093, 1
    %2095 = vsyncpa [#allocation13], 1

</llo_original>
